<compile_context>
chip_gen: v6e
topology: v6e:2x2x1
jax: 0.10.0
libtpu: 0.0.40
codegen_flags: <defaults>
</compile_context>

<pallas_src>
import jax
import jax.numpy as jnp
from jax import lax
from jax.experimental import pallas as pl
from jax.experimental.pallas import tpu as pltpu

TEMPERATURE = 4.0    # self.T in the PyTorch module
_EPS = 1e-12         # F.normalize eps
_CHUNK = 512         # in-kernel sub-chunk width (bounds vreg live ranges)
_TK_CAP = 32768      # never tile wider than this


def _vmem_budget_bytes():
    """Generation-aware VMEM budget with headroom for Mosaic internal scratch."""
    try:
        cap = int(pltpu.get_tpu_info().vmem_capacity_bytes)
    except Exception:
        cap = 64 << 20  # conservative default (v7x per-TC physical VMEM)
    # ~75% of physical VMEM, capped at 100 MiB on the 128 MiB parts (v5e/v6e).
    return min((cap * 3) // 4, 100 << 20)


def _choose_tk(B, D, itemsize, budget):
    """Largest lane-aligned K tile whose pipeline buffers fit the VMEM budget."""
    acc_bytes = 2 * B * B * 4           # two f32 (B, B) Gram accumulators
    headroom = 4 << 20                  # Mosaic internal scratch, semaphores, ...
    avail = budget - acc_bytes - headroom
    per_col = 4 * B * itemsize          # 2 inputs x 2 pipeline buffers, per column
    if avail < per_col * 128:
        # TODO(synk): tile the (B, B) Gram over (Bi, Bj) for very large batches.
        raise ValueError(
            f"batch {B} too large for un-tiled (B,B) Gram accumulators within "
            f"{budget >> 20} MiB of VMEM")
    tk_cap = min(avail // per_col, _TK_CAP)
    if D <= tk_cap:
        return int(D)                   # single K step over the full feature dim
    return int((tk_cap // 128) * 128)   # lane-aligned tile


def _make_kernel(D, tk, nk):
    """Build the Pallas kernel for a fixed (D, tk, nk) configuration."""
    chunk = min(tk, _CHUNK)
    n_full = tk // chunk
    rem = tk - n_full * chunk
    ragged = (D % tk) != 0              # last K tile has out-of-bounds lanes
    dn = (((1,), (1,)), ((), ()))       # contract last dim of both operands (A @ A^T)

    def accumulate(t_ref, s_ref, gt_ref, gs_ref, k, masked):
        def do_chunk(start, width):
            xt = t_ref[:, pl.ds(start, width)]
            xs = s_ref[:, pl.ds(start, width)]
            if masked:
                # Boundary-block contents beyond column D are NOT guaranteed
                # zero: mask them so neither the norms nor the Gram are corrupted.
                col = (k * tk + start
                       + lax.broadcasted_iota(jnp.int32, (1, width), 1))
                valid = col < D
                xt = jnp.where(valid, xt, 0)
                xs = jnp.where(valid, xs, 0)
            # NOTE: default MXU precision; request the multi-pass f32 matmul via
            # precision= if bit-closeness to fp32 torch.mm is ever required.
            gt_ref[...] += lax.dot_general(xt, xt, dimension_numbers=dn,
                                           preferred_element_type=jnp.float32)
            gs_ref[...] += lax.dot_general(xs, xs, dimension_numbers=dn,
                                           preferred_element_type=jnp.float32)

        if n_full == 1:
            do_chunk(0, chunk)
        else:
            def body(c, carry):
                do_chunk(pl.multiple_of(c * chunk, 128), chunk)
                return carry
            lax.fori_loop(0, n_full, body, 0, unroll=True)
        if rem:
            do_chunk(n_full * chunk, rem)

    def kernel(t_ref, s_ref, loss_ref, gt_ref, gs_ref):
        k = pl.program_id(0)

        @pl.when(k == 0)
        def _init():
            gt_ref[...] = jnp.zeros_like(gt_ref)
            gs_ref[...] = jnp.zeros_like(gs_ref)

        if not ragged:
            accumulate(t_ref, s_ref, gt_ref, gs_ref, k, masked=False)
        elif nk == 1:
            accumulate(t_ref, s_ref, gt_ref, gs_ref, k, masked=True)
        else:
            @pl.when(k < nk - 1)
            def _interior():
                accumulate(t_ref, s_ref, gt_ref, gs_ref, k, masked=False)

            @pl.when(k == nk - 1)
            def _boundary():
                accumulate(t_ref, s_ref, gt_ref, gs_ref, k, masked=True)

        @pl.when(k == nk - 1)
        def _finalize():
            gram_t = gt_ref[...]
            gram_s = gs_ref[...]
            B = gram_t.shape[0]
            T = jnp.float32(TEMPERATURE)
            inv_T = jnp.float32(1.0 / TEMPERATURE)
            eps2 = jnp.float32(_EPS * _EPS)

            rows = lax.broadcasted_iota(jnp.int32, (B, B), 0)
            cols = lax.broadcasted_iota(jnp.int32, (B, B), 1)
            eye = rows == cols

            def normalized_logits(gram):
                # diag(G) == ||row||^2; extract as both column and row vector
                # (Gram is symmetric) to avoid transposing a (B,1) vector.
                diag_col = jnp.sum(jnp.where(eye, gram, 0.0), axis=1, keepdims=True)
                diag_row = jnp.sum(jnp.where(eye, gram, 0.0), axis=0, keepdims=True)
                # F.normalize: x / max(||x||, eps) == x * rsqrt(max(||x||^2, eps^2))
                inv_col = lax.rsqrt(jnp.maximum(diag_col, eps2))
                inv_row = lax.rsqrt(jnp.maximum(diag_row, eps2))
                return gram * inv_col * inv_row * inv_T

            logits_t = normalized_logits(gram_t)
            logits_s = normalized_logits(gram_s)

            def log_softmax_rows(z):
                m = jnp.max(z, axis=1, keepdims=True)
                zs = z - m
                lse = jnp.log(jnp.sum(jnp.exp(zs), axis=1, keepdims=True))
                return zs - lse

            log_p_t = log_softmax_rows(logits_t)
            log_p_s = log_softmax_rows(logits_s)
            p_t = jnp.exp(log_p_t)

            # F.kl_div(log_p_s, p_t, size_average=False) = sum(p_t*(log p_t - log p_s))
            kl = jnp.sum(p_t * (log_p_t - log_p_s))
            loss_ref[0] = kl * (T * T) / jnp.float32(B)

    return kernel


def similarity_preserving_loss(feat_t, feat_s, *, tk_override=None):
    """Pallas TPU implementation of Similarity_preserving.forward(FeaT, FeaS)."""
    assert feat_t.shape == feat_s.shape, (feat_t.shape, feat_s.shape)
    assert feat_t.dtype == feat_s.dtype, (feat_t.dtype, feat_s.dtype)
    B, D = feat_t.shape
    if B == 0:
        return jnp.float32(0.0)

    itemsize = jnp.dtype(feat_t.dtype).itemsize
    budget = _vmem_budget_bytes()
    if tk_override is not None:
        tk = min(int(tk_override), D)
        assert tk == D or tk % 128 == 0, "tk_override must be a multiple of 128"
    else:
        tk = _choose_tk(B, D, itemsize, budget)
    nk = (D + tk - 1) // tk

    kernel = _make_kernel(D, tk, nk)

    out = pl.pallas_call(
        kernel,
        out_shape=jax.ShapeDtypeStruct((1,), jnp.float32),
        grid_spec=pltpu.PrefetchScalarGridSpec(
            num_scalar_prefetch=0,
            grid=(nk,),
            in_specs=[
                pl.BlockSpec((B, tk), lambda k: (0, k)),
                pl.BlockSpec((B, tk), lambda k: (0, k)),
            ],
            out_specs=pl.BlockSpec(memory_space=pltpu.MemorySpace.SMEM),
            scratch_shapes=[
                pltpu.VMEM((B, B), jnp.float32),
                pltpu.VMEM((B, B), jnp.float32),
            ],
        ),
        compiler_params=pltpu.CompilerParams(
            dimension_semantics=("arbitrary",),
            vmem_limit_bytes=int(budget),
        ),
    )(feat_t, feat_s)
    return out[0]


def _reference(feat_t, feat_s):
    """Pure-JAX reference mirroring the PyTorch forward (fp32, HIGHEST matmul)."""
    T = TEMPERATURE
    eps = 1e-12
    tn = feat_t / jnp.maximum(jnp.linalg.norm(feat_t, axis=1, keepdims=True), eps)
    sn = feat_s / jnp.maximum(jnp.linalg.norm(feat_s, axis=1, keepdims=True), eps)
    hp = jax.lax.Precision.HIGHEST
    sim_t = jnp.dot(tn, tn.T, precision=hp)
    sim_s = jnp.dot(sn, sn.T, precision=hp)
    log_p_s = jax.nn.log_softmax(sim_s / T, axis=1)
    log_p_t = jax.nn.log_softmax(sim_t / T, axis=1)
    p_t = jnp.exp(log_p_t)
    kl = jnp.sum(p_t * (log_p_t - log_p_s))
    return kl * T * T / sim_s.shape[0]


if __name__ == "__main__":
    key = jax.random.PRNGKey(0)
    k1, k2 = jax.random.split(key)

    # Flattened conv features, e.g. C=8, H=16, W=16 -> D=2048. Budget-driven tk
    # takes the whole feature dim in one grid step (chunked internally).
    B, D = 8, 2048
    feat_t = jax.random.normal(k1, (B, D), dtype=jnp.float32)  # teacher features
    feat_s = jax.random.normal(k2, (B, D), dtype=jnp.float32)  # student features

    loss = jax.block_until_ready(similarity_preserving_loss(feat_t, feat_s))
    ref = _reference(feat_t, feat_s)
    assert bool(jnp.isfinite(loss)), loss
    # Default MXU precision vs the reference's Precision.HIGHEST — the smooth
    # softmax/KL absorbs the drift; keep a modest tolerance.
    assert jnp.allclose(loss, ref, rtol=5e-3, atol=1e-5), (loss, ref)

    # Ragged-D, multi-K-tile path: D=300 with tk=128 -> 3 grid steps, the last
    # tile masked in-kernel (no wrapper-side padding pass).
    B2, D2 = 8, 300
    f_t2 = jax.random.normal(jax.random.PRNGKey(1), (B2, D2), dtype=jnp.float32)
    f_s2 = jax.random.normal(jax.random.PRNGKey(2), (B2, D2), dtype=jnp.float32)
    loss2 = jax.block_until_ready(
        similarity_preserving_loss(f_t2, f_s2, tk_override=128))
    ref2 = _reference(f_t2, f_s2)
    assert bool(jnp.isfinite(loss2)), loss2
    assert jnp.allclose(loss2, ref2, rtol=5e-3, atol=1e-5), (loss2, ref2)

    print("KERNEL_OK")
</pallas_src>

<mosaic_0001>
module attributes {stable_mosaic.version = 11 : i64} {
  func.func @kernel(%arg0: i32, %arg1: memref<8x2048xf32, #tpu.memory_space<vmem>>, %arg2: memref<8x2048xf32, #tpu.memory_space<vmem>>, %arg3: memref<1xf32, #tpu.memory_space<smem>>, %arg4: memref<8x8xf32, #tpu.memory_space<vmem>>, %arg5: memref<8x8xf32, #tpu.memory_space<vmem>>) attributes {dimension_semantics = [#tpu.dimension_semantics<arbitrary>], iteration_bounds = array<i64: 1>, scalar_prefetch = 0 : i64, scratch_operands = 2 : i64, tpu.core_type = #tpu.core_type<tc>, window_params = [{transform_indices = @transform_0, window_bounds = array<i64: 8, 2048>}, {transform_indices = @transform_1, window_bounds = array<i64: 8, 2048>}, {transform_indices = @transform_2, window_bounds = array<i64: 1>}]} {
    %c0_i32 = arith.constant 0 : i32
    %0 = arith.cmpi eq, %arg0, %c0_i32 : i32
    %1 = arith.extui %0 : i1 to i32
    %c0_i32_0 = arith.constant 0 : i32
    %2 = arith.cmpi ne, %1, %c0_i32_0 : i32
    scf.if %2 {
      %cst_53 = arith.constant 0.000000e+00 : f32
      %62 = vector.broadcast %cst_53 : f32 to vector<8x8xf32>
      %c0_54 = arith.constant 0 : index
      %c0_55 = arith.constant 0 : index
      %63 = vector.load %arg4[%c0_54, %c0_55] : memref<8x8xf32, #tpu.memory_space<vmem>>, vector<8x8xf32>
      tpu.vector_store %arg4[%c0_54, %c0_55], %62 {strides = array<i32>} : memref<8x8xf32, #tpu.memory_space<vmem>>, vector<8x8xf32>,
      %cst_56 = arith.constant 0.000000e+00 : f32
      %64 = vector.broadcast %cst_56 : f32 to vector<8x8xf32>
      %c0_57 = arith.constant 0 : index
      %c0_58 = arith.constant 0 : index
      %65 = vector.load %arg5[%c0_57, %c0_58] : memref<8x8xf32, #tpu.memory_space<vmem>>, vector<8x8xf32>
      tpu.vector_store %arg5[%c0_57, %c0_58], %64 {strides = array<i32>} : memref<8x8xf32, #tpu.memory_space<vmem>>, vector<8x8xf32>,
    } else {
    }
    %c0_i32_1 = arith.constant 0 : i32
    %c512_i32 = arith.constant 512 : i32
    %3 = arith.muli %c0_i32_1, %c512_i32 : i32
    %4 = tpu.assume_multiple %3, 128 : i32
    %c0 = arith.constant 0 : index
    %5 = arith.index_cast %4 : i32 to index
    %6 = vector.load %arg1[%c0, %5] : memref<8x2048xf32, #tpu.memory_space<vmem>>, vector<8x512xf32>
    %c0_2 = arith.constant 0 : index
    %7 = arith.index_cast %4 : i32 to index
    %8 = vector.load %arg2[%c0_2, %7] : memref<8x2048xf32, #tpu.memory_space<vmem>>, vector<8x512xf32>
    %c0_3 = arith.constant 0 : index
    %c0_4 = arith.constant 0 : index
    %9 = vector.load %arg4[%c0_3, %c0_4] : memref<8x8xf32, #tpu.memory_space<vmem>>, vector<8x8xf32>
    %cst = arith.constant dense<0.000000e+00> : vector<8x8xf32>
    %10 = tpu.matmul %6, %6, %cst {dimension_numbers = #tpu.dot_dimension_numbers<[1], [1], [0], [0], [0, 0, 1, 0], [], []>} : vector<8x512xf32>, vector<8x512xf32>, vector<8x8xf32> -> vector<8x8xf32>
    %11 = arith.addf %9, %10 : vector<8x8xf32>
    %c0_5 = arith.constant 0 : index
    %c0_6 = arith.constant 0 : index
    %12 = vector.load %arg4[%c0_5, %c0_6] : memref<8x8xf32, #tpu.memory_space<vmem>>, vector<8x8xf32>
    tpu.vector_store %arg4[%c0_5, %c0_6], %11 {strides = array<i32>} : memref<8x8xf32, #tpu.memory_space<vmem>>, vector<8x8xf32>,
    %c0_7 = arith.constant 0 : index
    %c0_8 = arith.constant 0 : index
    %13 = vector.load %arg5[%c0_7, %c0_8] : memref<8x8xf32, #tpu.memory_space<vmem>>, vector<8x8xf32>
    %cst_9 = arith.constant dense<0.000000e+00> : vector<8x8xf32>
    %14 = tpu.matmul %8, %8, %cst_9 {dimension_numbers = #tpu.dot_dimension_numbers<[1], [1], [0], [0], [0, 0, 1, 0], [], []>} : vector<8x512xf32>, vector<8x512xf32>, vector<8x8xf32> -> vector<8x8xf32>
    %15 = arith.addf %13, %14 : vector<8x8xf32>
    %c0_10 = arith.constant 0 : index
    %c0_11 = arith.constant 0 : index
    %16 = vector.load %arg5[%c0_10, %c0_11] : memref<8x8xf32, #tpu.memory_space<vmem>>, vector<8x8xf32>
    tpu.vector_store %arg5[%c0_10, %c0_11], %15 {strides = array<i32>} : memref<8x8xf32, #tpu.memory_space<vmem>>, vector<8x8xf32>,
    %c1_i32 = arith.constant 1 : i32
    %c512_i32_12 = arith.constant 512 : i32
    %17 = arith.muli %c1_i32, %c512_i32_12 : i32
    %18 = tpu.assume_multiple %17, 128 : i32
    %c0_13 = arith.constant 0 : index
    %19 = arith.index_cast %18 : i32 to index
    %20 = vector.load %arg1[%c0_13, %19] : memref<8x2048xf32, #tpu.memory_space<vmem>>, vector<8x512xf32>
    %c0_14 = arith.constant 0 : index
    %21 = arith.index_cast %18 : i32 to index
    %22 = vector.load %arg2[%c0_14, %21] : memref<8x2048xf32, #tpu.memory_space<vmem>>, vector<8x512xf32>
    %c0_15 = arith.constant 0 : index
    %c0_16 = arith.constant 0 : index
    %23 = vector.load %arg4[%c0_15, %c0_16] : memref<8x8xf32, #tpu.memory_space<vmem>>, vector<8x8xf32>
    %cst_17 = arith.constant dense<0.000000e+00> : vector<8x8xf32>
    %24 = tpu.matmul %20, %20, %cst_17 {dimension_numbers = #tpu.dot_dimension_numbers<[1], [1], [0], [0], [0, 0, 1, 0], [], []>} : vector<8x512xf32>, vector<8x512xf32>, vector<8x8xf32> -> vector<8x8xf32>
    %25 = arith.addf %23, %24 : vector<8x8xf32>
    %c0_18 = arith.constant 0 : index
    %c0_19 = arith.constant 0 : index
    %26 = vector.load %arg4[%c0_18, %c0_19] : memref<8x8xf32, #tpu.memory_space<vmem>>, vector<8x8xf32>
    tpu.vector_store %arg4[%c0_18, %c0_19], %25 {strides = array<i32>} : memref<8x8xf32, #tpu.memory_space<vmem>>, vector<8x8xf32>,
    %c0_20 = arith.constant 0 : index
    %c0_21 = arith.constant 0 : index
    %27 = vector.load %arg5[%c0_20, %c0_21] : memref<8x8xf32, #tpu.memory_space<vmem>>, vector<8x8xf32>
    %cst_22 = arith.constant dense<0.000000e+00> : vector<8x8xf32>
    %28 = tpu.matmul %22, %22, %cst_22 {dimension_numbers = #tpu.dot_dimension_numbers<[1], [1], [0], [0], [0, 0, 1, 0], [], []>} : vector<8x512xf32>, vector<8x512xf32>, vector<8x8xf32> -> vector<8x8xf32>
    %29 = arith.addf %27, %28 : vector<8x8xf32>
    %c0_23 = arith.constant 0 : index
    %c0_24 = arith.constant 0 : index
    %30 = vector.load %arg5[%c0_23, %c0_24] : memref<8x8xf32, #tpu.memory_space<vmem>>, vector<8x8xf32>
    tpu.vector_store %arg5[%c0_23, %c0_24], %29 {strides = array<i32>} : memref<8x8xf32, #tpu.memory_space<vmem>>, vector<8x8xf32>,
    %c2_i32 = arith.constant 2 : i32
    %c512_i32_25 = arith.constant 512 : i32
    %31 = arith.muli %c2_i32, %c512_i32_25 : i32
    %32 = tpu.assume_multiple %31, 128 : i32
    %c0_26 = arith.constant 0 : index
    %33 = arith.index_cast %32 : i32 to index
    %34 = vector.load %arg1[%c0_26, %33] : memref<8x2048xf32, #tpu.memory_space<vmem>>, vector<8x512xf32>
    %c0_27 = arith.constant 0 : index
    %35 = arith.index_cast %32 : i32 to index
    %36 = vector.load %arg2[%c0_27, %35] : memref<8x2048xf32, #tpu.memory_space<vmem>>, vector<8x512xf32>
    %c0_28 = arith.constant 0 : index
    %c0_29 = arith.constant 0 : index
    %37 = vector.load %arg4[%c0_28, %c0_29] : memref<8x8xf32, #tpu.memory_space<vmem>>, vector<8x8xf32>
    %cst_30 = arith.constant dense<0.000000e+00> : vector<8x8xf32>
    %38 = tpu.matmul %34, %34, %cst_30 {dimension_numbers = #tpu.dot_dimension_numbers<[1], [1], [0], [0], [0, 0, 1, 0], [], []>} : vector<8x512xf32>, vector<8x512xf32>, vector<8x8xf32> -> vector<8x8xf32>
    %39 = arith.addf %37, %38 : vector<8x8xf32>
    %c0_31 = arith.constant 0 : index
    %c0_32 = arith.constant 0 : index
    %40 = vector.load %arg4[%c0_31, %c0_32] : memref<8x8xf32, #tpu.memory_space<vmem>>, vector<8x8xf32>
    tpu.vector_store %arg4[%c0_31, %c0_32], %39 {strides = array<i32>} : memref<8x8xf32, #tpu.memory_space<vmem>>, vector<8x8xf32>,
    %c0_33 = arith.constant 0 : index
    %c0_34 = arith.constant 0 : index
    %41 = vector.load %arg5[%c0_33, %c0_34] : memref<8x8xf32, #tpu.memory_space<vmem>>, vector<8x8xf32>
    %cst_35 = arith.constant dense<0.000000e+00> : vector<8x8xf32>
    %42 = tpu.matmul %36, %36, %cst_35 {dimension_numbers = #tpu.dot_dimension_numbers<[1], [1], [0], [0], [0, 0, 1, 0], [], []>} : vector<8x512xf32>, vector<8x512xf32>, vector<8x8xf32> -> vector<8x8xf32>
    %43 = arith.addf %41, %42 : vector<8x8xf32>
    %c0_36 = arith.constant 0 : index
    %c0_37 = arith.constant 0 : index
    %44 = vector.load %arg5[%c0_36, %c0_37] : memref<8x8xf32, #tpu.memory_space<vmem>>, vector<8x8xf32>
    tpu.vector_store %arg5[%c0_36, %c0_37], %43 {strides = array<i32>} : memref<8x8xf32, #tpu.memory_space<vmem>>, vector<8x8xf32>,
    %c3_i32 = arith.constant 3 : i32
    %c512_i32_38 = arith.constant 512 : i32
    %45 = arith.muli %c3_i32, %c512_i32_38 : i32
    %46 = tpu.assume_multiple %45, 128 : i32
    %c0_39 = arith.constant 0 : index
    %47 = arith.index_cast %46 : i32 to index
    %48 = vector.load %arg1[%c0_39, %47] : memref<8x2048xf32, #tpu.memory_space<vmem>>, vector<8x512xf32>
    %c0_40 = arith.constant 0 : index
    %49 = arith.index_cast %46 : i32 to index
    %50 = vector.load %arg2[%c0_40, %49] : memref<8x2048xf32, #tpu.memory_space<vmem>>, vector<8x512xf32>
    %c0_41 = arith.constant 0 : index
    %c0_42 = arith.constant 0 : index
    %51 = vector.load %arg4[%c0_41, %c0_42] : memref<8x8xf32, #tpu.memory_space<vmem>>, vector<8x8xf32>
    %cst_43 = arith.constant dense<0.000000e+00> : vector<8x8xf32>
    %52 = tpu.matmul %48, %48, %cst_43 {dimension_numbers = #tpu.dot_dimension_numbers<[1], [1], [0], [0], [0, 0, 1, 0], [], []>} : vector<8x512xf32>, vector<8x512xf32>, vector<8x8xf32> -> vector<8x8xf32>
    %53 = arith.addf %51, %52 : vector<8x8xf32>
    %c0_44 = arith.constant 0 : index
    %c0_45 = arith.constant 0 : index
    %54 = vector.load %arg4[%c0_44, %c0_45] : memref<8x8xf32, #tpu.memory_space<vmem>>, vector<8x8xf32>
    tpu.vector_store %arg4[%c0_44, %c0_45], %53 {strides = array<i32>} : memref<8x8xf32, #tpu.memory_space<vmem>>, vector<8x8xf32>,
    %c0_46 = arith.constant 0 : index
    %c0_47 = arith.constant 0 : index
    %55 = vector.load %arg5[%c0_46, %c0_47] : memref<8x8xf32, #tpu.memory_space<vmem>>, vector<8x8xf32>
    %cst_48 = arith.constant dense<0.000000e+00> : vector<8x8xf32>
    %56 = tpu.matmul %50, %50, %cst_48 {dimension_numbers = #tpu.dot_dimension_numbers<[1], [1], [0], [0], [0, 0, 1, 0], [], []>} : vector<8x512xf32>, vector<8x512xf32>, vector<8x8xf32> -> vector<8x8xf32>
    %57 = arith.addf %55, %56 : vector<8x8xf32>
    %c0_49 = arith.constant 0 : index
    %c0_50 = arith.constant 0 : index
    %58 = vector.load %arg5[%c0_49, %c0_50] : memref<8x8xf32, #tpu.memory_space<vmem>>, vector<8x8xf32>
    tpu.vector_store %arg5[%c0_49, %c0_50], %57 {strides = array<i32>} : memref<8x8xf32, #tpu.memory_space<vmem>>, vector<8x8xf32>,
    %c4_i32 = arith.constant 4 : i32
    %c0_i32_51 = arith.constant 0 : i32
    %59 = arith.cmpi eq, %arg0, %c0_i32_51 : i32
    %60 = arith.extui %59 : i1 to i32
    %c0_i32_52 = arith.constant 0 : i32
    %61 = arith.cmpi ne, %60, %c0_i32_52 : i32
    scf.if %61 {
      %c0_53 = arith.constant 0 : index
      %c0_54 = arith.constant 0 : index
      %62 = vector.load %arg4[%c0_53, %c0_54] : memref<8x8xf32, #tpu.memory_space<vmem>>, vector<8x8xf32>
      %c0_55 = arith.constant 0 : index
      %c0_56 = arith.constant 0 : index
      %63 = vector.load %arg5[%c0_55, %c0_56] : memref<8x8xf32, #tpu.memory_space<vmem>>, vector<8x8xf32>
      %64 = tpu.iota {dimensions = array<i32: 0>} : vector<8x8xi32>
      %65 = tpu.iota {dimensions = array<i32: 1>} : vector<8x8xi32>
      %66 = arith.cmpi eq, %64, %65 : vector<8x8xi32>
      %cst_57 = arith.constant 0.000000e+00 : f32
      %67 = vector.broadcast %cst_57 : f32 to vector<8x8xf32>
      %68 = arith.select %66, %62, %67 : vector<8x8xi1>, vector<8x8xf32>
      %cst_58 = arith.constant dense<0.000000e+00> : vector<8xf32>
      %69 = vector.multi_reduction <add>, %68, %cst_58 [1] : vector<8x8xf32> to vector<8xf32>
      %70 = vector.shape_cast %69 : vector<8xf32> to vector<8x1xf32>
      %cst_59 = arith.constant 0.000000e+00 : f32
      %71 = vector.broadcast %cst_59 : f32 to vector<8x8xf32>
      %72 = arith.select %66, %62, %71 : vector<8x8xi1>, vector<8x8xf32>
      %cst_60 = arith.constant dense<0.000000e+00> : vector<8xf32>
      %73 = vector.multi_reduction <add>, %72, %cst_60 [0] : vector<8x8xf32> to vector<8xf32>
      %74 = vector.shape_cast %73 : vector<8xf32> to vector<1x8xf32>
      %cst_61 = arith.constant 1.000000e-24 : f32
      %75 = vector.broadcast %cst_61 : f32 to vector<8x1xf32>
      %76 = arith.maximumf %70, %75 : vector<8x1xf32>
      %77 = math.rsqrt %76 : vector<8x1xf32>
      %cst_62 = arith.constant 1.000000e-24 : f32
      %78 = vector.broadcast %cst_62 : f32 to vector<1x8xf32>
      %79 = arith.maximumf %74, %78 : vector<1x8xf32>
      %80 = math.rsqrt %79 : vector<1x8xf32>
      %81 = vector.broadcast %77 : vector<8x1xf32> to vector<8x8xf32>
      %82 = arith.mulf %62, %81 : vector<8x8xf32>
      %83 = vector.broadcast %80 : vector<1x8xf32> to vector<8x8xf32>
      %84 = arith.mulf %82, %83 : vector<8x8xf32>
      %cst_63 = arith.constant 2.500000e-01 : f32
      %85 = vector.broadcast %cst_63 : f32 to vector<8x8xf32>
      %86 = arith.mulf %84, %85 : vector<8x8xf32>
      %cst_64 = arith.constant 0.000000e+00 : f32
      %87 = vector.broadcast %cst_64 : f32 to vector<8x8xf32>
      %88 = arith.select %66, %63, %87 : vector<8x8xi1>, vector<8x8xf32>
      %cst_65 = arith.constant dense<0.000000e+00> : vector<8xf32>
      %89 = vector.multi_reduction <add>, %88, %cst_65 [1] : vector<8x8xf32> to vector<8xf32>
      %90 = vector.shape_cast %89 : vector<8xf32> to vector<8x1xf32>
      %cst_66 = arith.constant 0.000000e+00 : f32
      %91 = vector.broadcast %cst_66 : f32 to vector<8x8xf32>
      %92 = arith.select %66, %63, %91 : vector<8x8xi1>, vector<8x8xf32>
      %cst_67 = arith.constant dense<0.000000e+00> : vector<8xf32>
      %93 = vector.multi_reduction <add>, %92, %cst_67 [0] : vector<8x8xf32> to vector<8xf32>
      %94 = vector.shape_cast %93 : vector<8xf32> to vector<1x8xf32>
      %cst_68 = arith.constant 1.000000e-24 : f32
      %95 = vector.broadcast %cst_68 : f32 to vector<8x1xf32>
      %96 = arith.maximumf %90, %95 : vector<8x1xf32>
      %97 = math.rsqrt %96 : vector<8x1xf32>
      %cst_69 = arith.constant 1.000000e-24 : f32
      %98 = vector.broadcast %cst_69 : f32 to vector<1x8xf32>
      %99 = arith.maximumf %94, %98 : vector<1x8xf32>
      %100 = math.rsqrt %99 : vector<1x8xf32>
      %101 = vector.broadcast %97 : vector<8x1xf32> to vector<8x8xf32>
      %102 = arith.mulf %63, %101 : vector<8x8xf32>
      %103 = vector.broadcast %100 : vector<1x8xf32> to vector<8x8xf32>
      %104 = arith.mulf %102, %103 : vector<8x8xf32>
      %cst_70 = arith.constant 2.500000e-01 : f32
      %105 = vector.broadcast %cst_70 : f32 to vector<8x8xf32>
      %106 = arith.mulf %104, %105 : vector<8x8xf32>
      %cst_71 = arith.constant dense<0xFF800000> : vector<8xf32>
      %107 = vector.multi_reduction <maximumf>, %86, %cst_71 [1] : vector<8x8xf32> to vector<8xf32>
      %108 = vector.shape_cast %107 : vector<8xf32> to vector<8x1xf32>
      %109 = vector.broadcast %108 : vector<8x1xf32> to vector<8x8xf32>
      %110 = arith.subf %86, %109 : vector<8x8xf32>
      %111 = math.exp %110 : vector<8x8xf32>
      %cst_72 = arith.constant dense<0.000000e+00> : vector<8xf32>
      %112 = vector.multi_reduction <add>, %111, %cst_72 [1] : vector<8x8xf32> to vector<8xf32>
      %113 = vector.shape_cast %112 : vector<8xf32> to vector<8x1xf32>
      %114 = math.log %113 : vector<8x1xf32>
      %115 = vector.broadcast %114 : vector<8x1xf32> to vector<8x8xf32>
      %116 = arith.subf %110, %115 : vector<8x8xf32>
      %cst_73 = arith.constant dense<0xFF800000> : vector<8xf32>
      %117 = vector.multi_reduction <maximumf>, %106, %cst_73 [1] : vector<8x8xf32> to vector<8xf32>
      %118 = vector.shape_cast %117 : vector<8xf32> to vector<8x1xf32>
      %119 = vector.broadcast %118 : vector<8x1xf32> to vector<8x8xf32>
      %120 = arith.subf %106, %119 : vector<8x8xf32>
      %121 = math.exp %120 : vector<8x8xf32>
      %cst_74 = arith.constant dense<0.000000e+00> : vector<8xf32>
      %122 = vector.multi_reduction <add>, %121, %cst_74 [1] : vector<8x8xf32> to vector<8xf32>
      %123 = vector.shape_cast %122 : vector<8xf32> to vector<8x1xf32>
      %124 = math.log %123 : vector<8x1xf32>
      %125 = vector.broadcast %124 : vector<8x1xf32> to vector<8x8xf32>
      %126 = arith.subf %120, %125 : vector<8x8xf32>
      %127 = math.exp %116 : vector<8x8xf32>
      %128 = arith.subf %116, %126 : vector<8x8xf32>
      %129 = arith.mulf %127, %128 : vector<8x8xf32>
      %130 = vector.shape_cast %129 : vector<8x8xf32> to vector<1x8x8xf32>
      %cst_75 = arith.constant dense<0.000000e+00> : vector<1xf32>
      %131 = vector.multi_reduction <add>, %130, %cst_75 [1, 2] : vector<1x8x8xf32> to vector<1xf32>
      %132 = vector.shape_cast %131 : vector<1xf32> to vector<1x1x1xf32>
      %133 = vector.extract %132[0, 0, 0] : f32 from vector<1x1x1xf32>
      %cst_76 = arith.constant 4.000000e+00 : f32
      %cst_77 = arith.constant 4.000000e+00 : f32
      %134 = arith.mulf %cst_76, %cst_77 : f32
      %135 = arith.mulf %133, %134 : f32
      %cst_78 = arith.constant 8.000000e+00 : f32
      %136 = arith.divf %135, %cst_78 : f32
      %c0_79 = arith.constant 0 : index
      %137 = memref.load %arg3[%c0_79] : memref<1xf32, #tpu.memory_space<smem>>
      memref.store %136, %arg3[%c0_79] : memref<1xf32, #tpu.memory_space<smem>>
    } else {
    }
    return
  }
  func.func @transform_0(%arg0: i32) -> (i32, i32) {
    %c0_i32 = arith.constant 0 : i32
    %c0_i32_0 = arith.constant 0 : i32
    return %c0_i32, %arg0 : i32, i32
  }
  func.func @transform_1(%arg0: i32) -> (i32, i32) {
    %c0_i32 = arith.constant 0 : i32
    %c0_i32_0 = arith.constant 0 : i32
    return %c0_i32, %arg0 : i32, i32
  }
  func.func @transform_2(%arg0: i32) -> i32 {
    %c0_i32 = arith.constant 0 : i32
    %c0_i32_0 = arith.constant 0 : i32
    return %c0_i32 : i32
  }
}

</mosaic_0001>

<llo_original>
// kernel: tpu_custom_call.1
$region0: #{tpu_custom_call.1}
  #allocation0 [shape = 'u32[]', space=smem, size = 0x4, offset = 0x4, fixed_abs, tag = 'smem constant byte address 0x4 - core index']
  #allocation1 [shape = 'u32[144,128]{1,0:T(1,128)}', space=vmem, size = 0x12000, scoped, tag = 'internal scratch']
  #allocation2 [shape = 'f32[8,8]{1,0:T(8,128)}', space=vmem, size = 0x1000, scoped, tag = 'scratch operand']
  #allocation3 [shape = 'f32[8,8]{1,0:T(8,128)}', space=vmem, size = 0x1000, scoped, tag = 'scratch operand']
  %s0 = inlined_call_operand.hbm [shape: f32[8,2048], index: 0, kind: input, shape index: {}]
  %s1 = inlined_call_operand.hbm [shape: f32[8,2048], index: 1, kind: input, shape index: {}]
  %s2 = inlined_call_operand.hbm [shape: f32[1], index: 2, kind: output, shape index: {}]
  %s3 = sld [smem:[#allocation0]]
  $region34: #{tpu_custom_call.1} parent=0
    _
  %s5 = ssub.s32 1, %s3
  %s6 = scalar_select 0, %s5, %s3
  $region1: #{tpu_custom_call.1} parent=0
    #allocation4 [shape = 'u8[65536]{0}', space=vmem, size = 0x10000, scoped, tag = 'input window, operand 0, single buffered']
    #allocation5 [shape = 's32[1]{0}', space=sflag, size = 0x4, scoped, tag = 'scoped memory for tpu_custom_call.1']
    #allocation6 [shape = 's32[1]{0}', space=sflag, size = 0x4, scoped, tag = 'scoped memory for tpu_custom_call.1']
    #allocation7 [shape = 'u8[65536]{0}', space=vmem, size = 0x10000, scoped, tag = 'input window, operand 1, single buffered']
    #allocation8 [shape = 's32[1]{0}', space=sflag, size = 0x4, scoped, tag = 'scoped memory for tpu_custom_call.1']
    #allocation9 [shape = 'u8[512]{0}', space=smem, size = 0x200, scoped, tag = 'output window, operand 0, single buffered']
    %7 = vsyncpa [#allocation5], 0
    %8 = vsyncpa [#allocation8], 0
    %9 = vsyncpa [#allocation6], 0
    // Predicated region
    $region2: #{tpu_custom_call.1} parent=1 // pred_check
      _
    $region3: #{tpu_custom_call.1} parent=1 // pred_check_branch
      %11 = sbr.rel (0) target = $region5
    $region4: #{tpu_custom_call.1} parent=1 // pred_region
      %s13 = ssub.s32 2048, 2048
      %14 = vsyncadd [#allocation5], %s13
      %s16 = sshll.u32 [#allocation4], 4
      %s17 = int_to_ptr.vmem [resolvable:$true] %s16
      %19 = dma.hbm_to_vmem [thread:$0]  %s0, 2048, %s17, [#allocation5]
    $region5: #{tpu_custom_call.1} parent=1 // pred_fallthru
      _
    // Predicated region
    $region6: #{tpu_custom_call.1} parent=1 // pred_check
      _
    $region7: #{tpu_custom_call.1} parent=1 // pred_check_branch
      %21 = sbr.rel (0) target = $region9
    $region8: #{tpu_custom_call.1} parent=1 // pred_region
      %s23 = ssub.s32 2048, 2048
      %24 = vsyncadd [#allocation8], %s23
      %s26 = sshll.u32 [#allocation7], 4
      %s27 = int_to_ptr.vmem [resolvable:$true] %s26
      %29 = dma.hbm_to_vmem [thread:$0]  %s1, 2048, %s27, [#allocation8]
    $region9: #{tpu_custom_call.1} parent=1 // pred_fallthru
      _
    // Predicated region
    $region10: #{tpu_custom_call.1} parent=1 // pred_check
      _
    $region11: #{tpu_custom_call.1} parent=1 // pred_check_branch
      %31 = sbr.rel (0) target = $region13
    $region12: #{tpu_custom_call.1} parent=1 // pred_region
      %32 = dma.done [#allocation5], 2048
    $region13: #{tpu_custom_call.1} parent=1 // pred_fallthru
      _
    // Predicated region
    $region14: #{tpu_custom_call.1} parent=1 // pred_check
      _
    $region15: #{tpu_custom_call.1} parent=1 // pred_check_branch
      %34 = sbr.rel (0) target = $region17
    $region16: #{tpu_custom_call.1} parent=1 // pred_region
      %35 = dma.done [#allocation8], 2048
    $region17: #{tpu_custom_call.1} parent=1 // pred_fallthru
      _
    %p36 = scmp.eq.s32.totalorder 0, 0
    // Predicated region
    $region18: #{tpu_custom_call.1} parent=1 // pred_check
      %p37 = pneg %p36
    $region19: #{tpu_custom_call.1} parent=1 // pred_check_branch
      %39 = sbr.rel (%p37) target = $region21
    $region20: #{tpu_custom_call.1} parent=1 // pred_region
      %vm40 = vcmask 64512
      %41 = vst.msk [vmem:[#allocation2] sm:$0xff] %vm40, 0.0
      %42 = vst.msk [vmem:[#allocation3] sm:$0xff] %vm40, 0.0
    $region21: #{tpu_custom_call.1} parent=1 // pred_fallthru
      _
    %v43 = vld [vmem:[#allocation4] sm:$0xff]
    %v44 = vld [vmem:[#allocation4 + $0x8] sm:$0xff]
    %v45 = vld [vmem:[#allocation4 + $0x10] sm:$0xff]
    %v46 = vld [vmem:[#allocation4 + $0x18] sm:$0xff]
    %v47 = vld [vmem:[#allocation7] sm:$0xff]
    %v48 = vld [vmem:[#allocation7 + $0x8] sm:$0xff]
    %v49 = vld [vmem:[#allocation7 + $0x10] sm:$0xff]
    %v50 = vld [vmem:[#allocation7 + $0x18] sm:$0xff]
    %v51 = vld [vmem:[#allocation2] sm:$0xff]
    %52 = vmatprep.subr.mxu0 0.0
    %53 = vmatpush1.xpose.msra.mxu0 0.0
    %54 = vmatprep.subr.mxu0 0.0
    %55 = vmatpush1.xpose.msra.mxu0 0.0
    %56 = vmatprep.subr.mxu0 0.0
    %57 = vmatpush1.xpose.msra.mxu0 0.0
    %58 = vmatprep.subr.mxu0 0.0
    %59 = vmatpush1.xpose.msra.mxu0 0.0
    %60 = vmatprep.subr.mxu0 0.0
    %61 = vmatpush1.xpose.msra.mxu0 0.0
    %62 = vmatprep.subr.mxu0 0.0
    %63 = vmatpush1.xpose.msra.mxu0 0.0
    %64 = vmatprep.subr.mxu0 0.0
    %65 = vmatpush1.xpose.msra.mxu0 0.0
    %66 = vmatprep.subr.mxu0 0.0
    %67 = vmatpush1.xpose.msra.mxu0 0.0
    %68 = vmatprep.subr.mxu0 0.0
    %69 = vmatpush1.xpose.msra.mxu0 0.0
    %70 = vmatprep.subr.mxu0 0.0
    %71 = vmatpush1.xpose.msra.mxu0 0.0
    %72 = vmatprep.subr.mxu0 0.0
    %73 = vmatpush1.xpose.msra.mxu0 0.0
    %74 = vmatprep.subr.mxu0 0.0
    %75 = vmatpush1.xpose.msra.mxu0 0.0
    %76 = vmatprep.subr.mxu0 0.0
    %77 = vmatpush1.xpose.msra.mxu0 0.0
    %78 = vmatprep.subr.mxu0 0.0
    %79 = vmatpush1.xpose.msra.mxu0 0.0
    %80 = vmatprep.subr.mxu0 0.0
    %81 = vmatpush1.xpose.msra.mxu0 0.0
    %82 = vmatprep.subr.mxu0 %v44
    %83 = vmatpush1.xpose.msra.mxu0 %v43
    %84 = vmatprep.subr.mxu0 0.0
    %85 = vmatpush2.xpose.msra.mxu0 0.0
    %86 = vmatprep.subr.mxu0 0.0
    %87 = vmatpush2.xpose.msra.mxu0 0.0
    %88 = vmatprep.subr.mxu0 0.0
    %89 = vmatpush2.xpose.msra.mxu0 0.0
    %90 = vmatprep.subr.mxu0 0.0
    %91 = vmatpush2.xpose.msra.mxu0 0.0
    %92 = vmatprep.subr.mxu0 0.0
    %93 = vmatpush2.xpose.msra.mxu0 0.0
    %94 = vmatprep.subr.mxu0 0.0
    %95 = vmatpush2.xpose.msra.mxu0 0.0
    %96 = vmatprep.subr.mxu0 0.0
    %97 = vmatpush2.xpose.msra.mxu0 0.0
    %98 = vmatprep.subr.mxu0 0.0
    %99 = vmatpush2.xpose.msra.mxu0 0.0
    %100 = vmatprep.subr.mxu0 0.0
    %101 = vmatpush2.xpose.msra.mxu0 0.0
    %102 = vmatprep.subr.mxu0 0.0
    %103 = vmatpush2.xpose.msra.mxu0 0.0
    %104 = vmatprep.subr.mxu0 0.0
    %105 = vmatpush2.xpose.msra.mxu0 0.0
    %106 = vmatprep.subr.mxu0 0.0
    %107 = vmatpush2.xpose.msra.mxu0 0.0
    %108 = vmatprep.subr.mxu0 0.0
    %109 = vmatpush2.xpose.msra.mxu0 0.0
    %110 = vmatprep.subr.mxu0 0.0
    %111 = vmatpush2.xpose.msra.mxu0 0.0
    %112 = vmatprep.subr.mxu0 0.0
    %113 = vmatpush2.xpose.msra.mxu0 0.0
    %114 = vmatprep.subr.mxu0 0.0
    %115 = vmatpush2.xpose.msra.mxu0 0.0
    %116 = vmatprep.mubr.f32.mxu0 %v44
    %117 = vmatmul.mubr.f32.gmra.mxu0 %v43
    %v118 = vpop.f32.mrf.mxu0
    %v119 = vadd.f32 0.0, %v118
    %v120 = vpop.f32.mrf.mxu0
    %121 = vdwg.mxu0
    %122 = vmatprep.subr.mxu0 0.0
    %123 = vmatpush1.xpose.msra.mxu0 0.0
    %124 = vmatprep.subr.mxu0 0.0
    %125 = vmatpush1.xpose.msra.mxu0 0.0
    %126 = vmatprep.subr.mxu0 0.0
    %127 = vmatpush1.xpose.msra.mxu0 0.0
    %128 = vmatprep.subr.mxu0 0.0
    %129 = vmatpush1.xpose.msra.mxu0 0.0
    %130 = vmatprep.subr.mxu0 0.0
    %131 = vmatpush1.xpose.msra.mxu0 0.0
    %132 = vmatprep.subr.mxu0 0.0
    %133 = vmatpush1.xpose.msra.mxu0 0.0
    %134 = vmatprep.subr.mxu0 0.0
    %135 = vmatpush1.xpose.msra.mxu0 0.0
    %136 = vmatprep.subr.mxu0 0.0
    %137 = vmatpush1.xpose.msra.mxu0 0.0
    %138 = vmatprep.subr.mxu0 0.0
    %139 = vmatpush1.xpose.msra.mxu0 0.0
    %140 = vmatprep.subr.mxu0 0.0
    %141 = vmatpush1.xpose.msra.mxu0 0.0
    %142 = vmatprep.subr.mxu0 0.0
    %143 = vmatpush1.xpose.msra.mxu0 0.0
    %144 = vmatprep.subr.mxu0 0.0
    %145 = vmatpush1.xpose.msra.mxu0 0.0
    %146 = vmatprep.subr.mxu0 0.0
    %147 = vmatpush1.xpose.msra.mxu0 0.0
    %148 = vmatprep.subr.mxu0 0.0
    %149 = vmatpush1.xpose.msra.mxu0 0.0
    %150 = vmatprep.subr.mxu0 0.0
    %151 = vmatpush1.xpose.msra.mxu0 0.0
    %152 = vmatprep.subr.mxu0 %v46
    %153 = vmatpush1.xpose.msra.mxu0 %v45
    %154 = vmatprep.subr.mxu0 0.0
    %155 = vmatpush2.xpose.msra.mxu0 0.0
    %156 = vmatprep.subr.mxu0 0.0
    %157 = vmatpush2.xpose.msra.mxu0 0.0
    %158 = vmatprep.subr.mxu0 0.0
    %159 = vmatpush2.xpose.msra.mxu0 0.0
    %160 = vmatprep.subr.mxu0 0.0
    %161 = vmatpush2.xpose.msra.mxu0 0.0
    %162 = vmatprep.subr.mxu0 0.0
    %163 = vmatpush2.xpose.msra.mxu0 0.0
    %164 = vmatprep.subr.mxu0 0.0
    %165 = vmatpush2.xpose.msra.mxu0 0.0
    %166 = vmatprep.subr.mxu0 0.0
    %167 = vmatpush2.xpose.msra.mxu0 0.0
    %168 = vmatprep.subr.mxu0 0.0
    %169 = vmatpush2.xpose.msra.mxu0 0.0
    %170 = vmatprep.subr.mxu0 0.0
    %171 = vmatpush2.xpose.msra.mxu0 0.0
    %172 = vmatprep.subr.mxu0 0.0
    %173 = vmatpush2.xpose.msra.mxu0 0.0
    %174 = vmatprep.subr.mxu0 0.0
    %175 = vmatpush2.xpose.msra.mxu0 0.0
    %176 = vmatprep.subr.mxu0 0.0
    %177 = vmatpush2.xpose.msra.mxu0 0.0
    %178 = vmatprep.subr.mxu0 0.0
    %179 = vmatpush2.xpose.msra.mxu0 0.0
    %180 = vmatprep.subr.mxu0 0.0
    %181 = vmatpush2.xpose.msra.mxu0 0.0
    %182 = vmatprep.subr.mxu0 0.0
    %183 = vmatpush2.xpose.msra.mxu0 0.0
    %184 = vmatprep.subr.mxu0 0.0
    %185 = vmatpush2.xpose.msra.mxu0 0.0
    %186 = vmatprep.mubr.f32.mxu0 %v46
    %187 = vmatmul.mubr.f32.gmra.mxu0 %v45
    %v188 = vpop.f32.mrf.mxu0
    %v189 = vadd.f32 %v119, %v188
    %v190 = vpop.f32.mrf.mxu0
    %191 = vdwg.mxu0
    %v192 = vadd.f32 %v51, %v189
    %vm193 = vcmask 64512
    %194 = vst.msk [vmem:[#allocation2] sm:$0xff] %vm193, %v192
    %v195 = vld [vmem:[#allocation3] sm:$0xff]
    %196 = vmatprep.subr.mxu0 0.0
    %197 = vmatpush1.xpose.msra.mxu0 0.0
    %198 = vmatprep.subr.mxu0 0.0
    %199 = vmatpush1.xpose.msra.mxu0 0.0
    %200 = vmatprep.subr.mxu0 0.0
    %201 = vmatpush1.xpose.msra.mxu0 0.0
    %202 = vmatprep.subr.mxu0 0.0
    %203 = vmatpush1.xpose.msra.mxu0 0.0
    %204 = vmatprep.subr.mxu0 0.0
    %205 = vmatpush1.xpose.msra.mxu0 0.0
    %206 = vmatprep.subr.mxu0 0.0
    %207 = vmatpush1.xpose.msra.mxu0 0.0
    %208 = vmatprep.subr.mxu0 0.0
    %209 = vmatpush1.xpose.msra.mxu0 0.0
    %210 = vmatprep.subr.mxu0 0.0
    %211 = vmatpush1.xpose.msra.mxu0 0.0
    %212 = vmatprep.subr.mxu0 0.0
    %213 = vmatpush1.xpose.msra.mxu0 0.0
    %214 = vmatprep.subr.mxu0 0.0
    %215 = vmatpush1.xpose.msra.mxu0 0.0
    %216 = vmatprep.subr.mxu0 0.0
    %217 = vmatpush1.xpose.msra.mxu0 0.0
    %218 = vmatprep.subr.mxu0 0.0
    %219 = vmatpush1.xpose.msra.mxu0 0.0
    %220 = vmatprep.subr.mxu0 0.0
    %221 = vmatpush1.xpose.msra.mxu0 0.0
    %222 = vmatprep.subr.mxu0 0.0
    %223 = vmatpush1.xpose.msra.mxu0 0.0
    %224 = vmatprep.subr.mxu0 0.0
    %225 = vmatpush1.xpose.msra.mxu0 0.0
    %226 = vmatprep.subr.mxu0 %v48
    %227 = vmatpush1.xpose.msra.mxu0 %v47
    %228 = vmatprep.subr.mxu0 0.0
    %229 = vmatpush2.xpose.msra.mxu0 0.0
    %230 = vmatprep.subr.mxu0 0.0
    %231 = vmatpush2.xpose.msra.mxu0 0.0
    %232 = vmatprep.subr.mxu0 0.0
    %233 = vmatpush2.xpose.msra.mxu0 0.0
    %234 = vmatprep.subr.mxu0 0.0
    %235 = vmatpush2.xpose.msra.mxu0 0.0
    %236 = vmatprep.subr.mxu0 0.0
    %237 = vmatpush2.xpose.msra.mxu0 0.0
    %238 = vmatprep.subr.mxu0 0.0
    %239 = vmatpush2.xpose.msra.mxu0 0.0
    %240 = vmatprep.subr.mxu0 0.0
    %241 = vmatpush2.xpose.msra.mxu0 0.0
    %242 = vmatprep.subr.mxu0 0.0
    %243 = vmatpush2.xpose.msra.mxu0 0.0
    %244 = vmatprep.subr.mxu0 0.0
    %245 = vmatpush2.xpose.msra.mxu0 0.0
    %246 = vmatprep.subr.mxu0 0.0
    %247 = vmatpush2.xpose.msra.mxu0 0.0
    %248 = vmatprep.subr.mxu0 0.0
    %249 = vmatpush2.xpose.msra.mxu0 0.0
    %250 = vmatprep.subr.mxu0 0.0
    %251 = vmatpush2.xpose.msra.mxu0 0.0
    %252 = vmatprep.subr.mxu0 0.0
    %253 = vmatpush2.xpose.msra.mxu0 0.0
    %254 = vmatprep.subr.mxu0 0.0
    %255 = vmatpush2.xpose.msra.mxu0 0.0
    %256 = vmatprep.subr.mxu0 0.0
    %257 = vmatpush2.xpose.msra.mxu0 0.0
    %258 = vmatprep.subr.mxu0 0.0
    %259 = vmatpush2.xpose.msra.mxu0 0.0
    %260 = vmatprep.mubr.f32.mxu0 %v48
    %261 = vmatmul.mubr.f32.gmra.mxu0 %v47
    %v262 = vpop.f32.mrf.mxu0
    %v263 = vadd.f32 0.0, %v262
    %v264 = vpop.f32.mrf.mxu0
    %265 = vdwg.mxu0
    %266 = vmatprep.subr.mxu0 0.0
    %267 = vmatpush1.xpose.msra.mxu0 0.0
    %268 = vmatprep.subr.mxu0 0.0
    %269 = vmatpush1.xpose.msra.mxu0 0.0
    %270 = vmatprep.subr.mxu0 0.0
    %271 = vmatpush1.xpose.msra.mxu0 0.0
    %272 = vmatprep.subr.mxu0 0.0
    %273 = vmatpush1.xpose.msra.mxu0 0.0
    %274 = vmatprep.subr.mxu0 0.0
    %275 = vmatpush1.xpose.msra.mxu0 0.0
    %276 = vmatprep.subr.mxu0 0.0
    %277 = vmatpush1.xpose.msra.mxu0 0.0
    %278 = vmatprep.subr.mxu0 0.0
    %279 = vmatpush1.xpose.msra.mxu0 0.0
    %280 = vmatprep.subr.mxu0 0.0
    %281 = vmatpush1.xpose.msra.mxu0 0.0
    %282 = vmatprep.subr.mxu0 0.0
    %283 = vmatpush1.xpose.msra.mxu0 0.0
    %284 = vmatprep.subr.mxu0 0.0
    %285 = vmatpush1.xpose.msra.mxu0 0.0
    %286 = vmatprep.subr.mxu0 0.0
    %287 = vmatpush1.xpose.msra.mxu0 0.0
    %288 = vmatprep.subr.mxu0 0.0
    %289 = vmatpush1.xpose.msra.mxu0 0.0
    %290 = vmatprep.subr.mxu0 0.0
    %291 = vmatpush1.xpose.msra.mxu0 0.0
    %292 = vmatprep.subr.mxu0 0.0
    %293 = vmatpush1.xpose.msra.mxu0 0.0
    %294 = vmatprep.subr.mxu0 0.0
    %295 = vmatpush1.xpose.msra.mxu0 0.0
    %296 = vmatprep.subr.mxu0 %v50
    %297 = vmatpush1.xpose.msra.mxu0 %v49
    %298 = vmatprep.subr.mxu0 0.0
    %299 = vmatpush2.xpose.msra.mxu0 0.0
    %300 = vmatprep.subr.mxu0 0.0
    %301 = vmatpush2.xpose.msra.mxu0 0.0
    %302 = vmatprep.subr.mxu0 0.0
    %303 = vmatpush2.xpose.msra.mxu0 0.0
    %304 = vmatprep.subr.mxu0 0.0
    %305 = vmatpush2.xpose.msra.mxu0 0.0
    %306 = vmatprep.subr.mxu0 0.0
    %307 = vmatpush2.xpose.msra.mxu0 0.0
    %308 = vmatprep.subr.mxu0 0.0
    %309 = vmatpush2.xpose.msra.mxu0 0.0
    %310 = vmatprep.subr.mxu0 0.0
    %311 = vmatpush2.xpose.msra.mxu0 0.0
    %312 = vmatprep.subr.mxu0 0.0
    %313 = vmatpush2.xpose.msra.mxu0 0.0
    %314 = vmatprep.subr.mxu0 0.0
    %315 = vmatpush2.xpose.msra.mxu0 0.0
    %316 = vmatprep.subr.mxu0 0.0
    %317 = vmatpush2.xpose.msra.mxu0 0.0
    %318 = vmatprep.subr.mxu0 0.0
    %319 = vmatpush2.xpose.msra.mxu0 0.0
    %320 = vmatprep.subr.mxu0 0.0
    %321 = vmatpush2.xpose.msra.mxu0 0.0
    %322 = vmatprep.subr.mxu0 0.0
    %323 = vmatpush2.xpose.msra.mxu0 0.0
    %324 = vmatprep.subr.mxu0 0.0
    %325 = vmatpush2.xpose.msra.mxu0 0.0
    %326 = vmatprep.subr.mxu0 0.0
    %327 = vmatpush2.xpose.msra.mxu0 0.0
    %328 = vmatprep.subr.mxu0 0.0
    %329 = vmatpush2.xpose.msra.mxu0 0.0
    %330 = vmatprep.mubr.f32.mxu0 %v50
    %331 = vmatmul.mubr.f32.gmra.mxu0 %v49
    %v332 = vpop.f32.mrf.mxu0
    %v333 = vadd.f32 %v263, %v332
    %v334 = vpop.f32.mrf.mxu0
    %335 = vdwg.mxu0
    %v336 = vadd.f32 %v195, %v333
    %337 = vst.msk [vmem:[#allocation3] sm:$0xff] %vm193, %v336
    %s338 = scalar_lea.vmem [#allocation4], 32
    %v339 = vld [vmem:[%s338] sm:$0xff]
    %v340 = vld [vmem:[%s338 + $0x8] sm:$0xff]
    %v341 = vld [vmem:[%s338 + $0x10] sm:$0xff]
    %v342 = vld [vmem:[%s338 + $0x18] sm:$0xff]
    %s343 = scalar_lea.vmem [#allocation7], 32
    %v344 = vld [vmem:[%s343] sm:$0xff]
    %v345 = vld [vmem:[%s343 + $0x8] sm:$0xff]
    %v346 = vld [vmem:[%s343 + $0x10] sm:$0xff]
    %v347 = vld [vmem:[%s343 + $0x18] sm:$0xff]
    %v348 = vld [vmem:[#allocation2] sm:$0xff]
    %349 = vmatprep.subr.mxu0 0.0
    %350 = vmatpush1.xpose.msra.mxu0 0.0
    %351 = vmatprep.subr.mxu0 0.0
    %352 = vmatpush1.xpose.msra.mxu0 0.0
    %353 = vmatprep.subr.mxu0 0.0
    %354 = vmatpush1.xpose.msra.mxu0 0.0
    %355 = vmatprep.subr.mxu0 0.0
    %356 = vmatpush1.xpose.msra.mxu0 0.0
    %357 = vmatprep.subr.mxu0 0.0
    %358 = vmatpush1.xpose.msra.mxu0 0.0
    %359 = vmatprep.subr.mxu0 0.0
    %360 = vmatpush1.xpose.msra.mxu0 0.0
    %361 = vmatprep.subr.mxu0 0.0
    %362 = vmatpush1.xpose.msra.mxu0 0.0
    %363 = vmatprep.subr.mxu0 0.0
    %364 = vmatpush1.xpose.msra.mxu0 0.0
    %365 = vmatprep.subr.mxu0 0.0
    %366 = vmatpush1.xpose.msra.mxu0 0.0
    %367 = vmatprep.subr.mxu0 0.0
    %368 = vmatpush1.xpose.msra.mxu0 0.0
    %369 = vmatprep.subr.mxu0 0.0
    %370 = vmatpush1.xpose.msra.mxu0 0.0
    %371 = vmatprep.subr.mxu0 0.0
    %372 = vmatpush1.xpose.msra.mxu0 0.0
    %373 = vmatprep.subr.mxu0 0.0
    %374 = vmatpush1.xpose.msra.mxu0 0.0
    %375 = vmatprep.subr.mxu0 0.0
    %376 = vmatpush1.xpose.msra.mxu0 0.0
    %377 = vmatprep.subr.mxu0 0.0
    %378 = vmatpush1.xpose.msra.mxu0 0.0
    %379 = vmatprep.subr.mxu0 %v340
    %380 = vmatpush1.xpose.msra.mxu0 %v339
    %381 = vmatprep.subr.mxu0 0.0
    %382 = vmatpush2.xpose.msra.mxu0 0.0
    %383 = vmatprep.subr.mxu0 0.0
    %384 = vmatpush2.xpose.msra.mxu0 0.0
    %385 = vmatprep.subr.mxu0 0.0
    %386 = vmatpush2.xpose.msra.mxu0 0.0
    %387 = vmatprep.subr.mxu0 0.0
    %388 = vmatpush2.xpose.msra.mxu0 0.0
    %389 = vmatprep.subr.mxu0 0.0
    %390 = vmatpush2.xpose.msra.mxu0 0.0
    %391 = vmatprep.subr.mxu0 0.0
    %392 = vmatpush2.xpose.msra.mxu0 0.0
    %393 = vmatprep.subr.mxu0 0.0
    %394 = vmatpush2.xpose.msra.mxu0 0.0
    %395 = vmatprep.subr.mxu0 0.0
    %396 = vmatpush2.xpose.msra.mxu0 0.0
    %397 = vmatprep.subr.mxu0 0.0
    %398 = vmatpush2.xpose.msra.mxu0 0.0
    %399 = vmatprep.subr.mxu0 0.0
    %400 = vmatpush2.xpose.msra.mxu0 0.0
    %401 = vmatprep.subr.mxu0 0.0
    %402 = vmatpush2.xpose.msra.mxu0 0.0
    %403 = vmatprep.subr.mxu0 0.0
    %404 = vmatpush2.xpose.msra.mxu0 0.0
    %405 = vmatprep.subr.mxu0 0.0
    %406 = vmatpush2.xpose.msra.mxu0 0.0
    %407 = vmatprep.subr.mxu0 0.0
    %408 = vmatpush2.xpose.msra.mxu0 0.0
    %409 = vmatprep.subr.mxu0 0.0
    %410 = vmatpush2.xpose.msra.mxu0 0.0
    %411 = vmatprep.subr.mxu0 0.0
    %412 = vmatpush2.xpose.msra.mxu0 0.0
    %413 = vmatprep.mubr.f32.mxu0 %v340
    %414 = vmatmul.mubr.f32.gmra.mxu0 %v339
    %v415 = vpop.f32.mrf.mxu0
    %v416 = vadd.f32 0.0, %v415
    %v417 = vpop.f32.mrf.mxu0
    %418 = vdwg.mxu0
    %419 = vmatprep.subr.mxu0 0.0
    %420 = vmatpush1.xpose.msra.mxu0 0.0
    %421 = vmatprep.subr.mxu0 0.0
    %422 = vmatpush1.xpose.msra.mxu0 0.0
    %423 = vmatprep.subr.mxu0 0.0
    %424 = vmatpush1.xpose.msra.mxu0 0.0
    %425 = vmatprep.subr.mxu0 0.0
    %426 = vmatpush1.xpose.msra.mxu0 0.0
    %427 = vmatprep.subr.mxu0 0.0
    %428 = vmatpush1.xpose.msra.mxu0 0.0
    %429 = vmatprep.subr.mxu0 0.0
    %430 = vmatpush1.xpose.msra.mxu0 0.0
    %431 = vmatprep.subr.mxu0 0.0
    %432 = vmatpush1.xpose.msra.mxu0 0.0
    %433 = vmatprep.subr.mxu0 0.0
    %434 = vmatpush1.xpose.msra.mxu0 0.0
    %435 = vmatprep.subr.mxu0 0.0
    %436 = vmatpush1.xpose.msra.mxu0 0.0
    %437 = vmatprep.subr.mxu0 0.0
    %438 = vmatpush1.xpose.msra.mxu0 0.0
    %439 = vmatprep.subr.mxu0 0.0
    %440 = vmatpush1.xpose.msra.mxu0 0.0
    %441 = vmatprep.subr.mxu0 0.0
    %442 = vmatpush1.xpose.msra.mxu0 0.0
    %443 = vmatprep.subr.mxu0 0.0
    %444 = vmatpush1.xpose.msra.mxu0 0.0
    %445 = vmatprep.subr.mxu0 0.0
    %446 = vmatpush1.xpose.msra.mxu0 0.0
    %447 = vmatprep.subr.mxu0 0.0
    %448 = vmatpush1.xpose.msra.mxu0 0.0
    %449 = vmatprep.subr.mxu0 %v342
    %450 = vmatpush1.xpose.msra.mxu0 %v341
    %451 = vmatprep.subr.mxu0 0.0
    %452 = vmatpush2.xpose.msra.mxu0 0.0
    %453 = vmatprep.subr.mxu0 0.0
    %454 = vmatpush2.xpose.msra.mxu0 0.0
    %455 = vmatprep.subr.mxu0 0.0
    %456 = vmatpush2.xpose.msra.mxu0 0.0
    %457 = vmatprep.subr.mxu0 0.0
    %458 = vmatpush2.xpose.msra.mxu0 0.0
    %459 = vmatprep.subr.mxu0 0.0
    %460 = vmatpush2.xpose.msra.mxu0 0.0
    %461 = vmatprep.subr.mxu0 0.0
    %462 = vmatpush2.xpose.msra.mxu0 0.0
    %463 = vmatprep.subr.mxu0 0.0
    %464 = vmatpush2.xpose.msra.mxu0 0.0
    %465 = vmatprep.subr.mxu0 0.0
    %466 = vmatpush2.xpose.msra.mxu0 0.0
    %467 = vmatprep.subr.mxu0 0.0
    %468 = vmatpush2.xpose.msra.mxu0 0.0
    %469 = vmatprep.subr.mxu0 0.0
    %470 = vmatpush2.xpose.msra.mxu0 0.0
    %471 = vmatprep.subr.mxu0 0.0
    %472 = vmatpush2.xpose.msra.mxu0 0.0
    %473 = vmatprep.subr.mxu0 0.0
    %474 = vmatpush2.xpose.msra.mxu0 0.0
    %475 = vmatprep.subr.mxu0 0.0
    %476 = vmatpush2.xpose.msra.mxu0 0.0
    %477 = vmatprep.subr.mxu0 0.0
    %478 = vmatpush2.xpose.msra.mxu0 0.0
    %479 = vmatprep.subr.mxu0 0.0
    %480 = vmatpush2.xpose.msra.mxu0 0.0
    %481 = vmatprep.subr.mxu0 0.0
    %482 = vmatpush2.xpose.msra.mxu0 0.0
    %483 = vmatprep.mubr.f32.mxu0 %v342
    %484 = vmatmul.mubr.f32.gmra.mxu0 %v341
    %v485 = vpop.f32.mrf.mxu0
    %v486 = vadd.f32 %v416, %v485
    %v487 = vpop.f32.mrf.mxu0
    %488 = vdwg.mxu0
    %v489 = vadd.f32 %v348, %v486
    %490 = vst.msk [vmem:[#allocation2] sm:$0xff] %vm193, %v489
    %v491 = vld [vmem:[#allocation3] sm:$0xff]
    %492 = vmatprep.subr.mxu0 0.0
    %493 = vmatpush1.xpose.msra.mxu0 0.0
    %494 = vmatprep.subr.mxu0 0.0
    %495 = vmatpush1.xpose.msra.mxu0 0.0
    %496 = vmatprep.subr.mxu0 0.0
    %497 = vmatpush1.xpose.msra.mxu0 0.0
    %498 = vmatprep.subr.mxu0 0.0
    %499 = vmatpush1.xpose.msra.mxu0 0.0
    %500 = vmatprep.subr.mxu0 0.0
    %501 = vmatpush1.xpose.msra.mxu0 0.0
    %502 = vmatprep.subr.mxu0 0.0
    %503 = vmatpush1.xpose.msra.mxu0 0.0
    %504 = vmatprep.subr.mxu0 0.0
    %505 = vmatpush1.xpose.msra.mxu0 0.0
    %506 = vmatprep.subr.mxu0 0.0
    %507 = vmatpush1.xpose.msra.mxu0 0.0
    %508 = vmatprep.subr.mxu0 0.0
    %509 = vmatpush1.xpose.msra.mxu0 0.0
    %510 = vmatprep.subr.mxu0 0.0
    %511 = vmatpush1.xpose.msra.mxu0 0.0
    %512 = vmatprep.subr.mxu0 0.0
    %513 = vmatpush1.xpose.msra.mxu0 0.0
    %514 = vmatprep.subr.mxu0 0.0
    %515 = vmatpush1.xpose.msra.mxu0 0.0
    %516 = vmatprep.subr.mxu0 0.0
    %517 = vmatpush1.xpose.msra.mxu0 0.0
    %518 = vmatprep.subr.mxu0 0.0
    %519 = vmatpush1.xpose.msra.mxu0 0.0
    %520 = vmatprep.subr.mxu0 0.0
    %521 = vmatpush1.xpose.msra.mxu0 0.0
    %522 = vmatprep.subr.mxu0 %v345
    %523 = vmatpush1.xpose.msra.mxu0 %v344
    %524 = vmatprep.subr.mxu0 0.0
    %525 = vmatpush2.xpose.msra.mxu0 0.0
    %526 = vmatprep.subr.mxu0 0.0
    %527 = vmatpush2.xpose.msra.mxu0 0.0
    %528 = vmatprep.subr.mxu0 0.0
    %529 = vmatpush2.xpose.msra.mxu0 0.0
    %530 = vmatprep.subr.mxu0 0.0
    %531 = vmatpush2.xpose.msra.mxu0 0.0
    %532 = vmatprep.subr.mxu0 0.0
    %533 = vmatpush2.xpose.msra.mxu0 0.0
    %534 = vmatprep.subr.mxu0 0.0
    %535 = vmatpush2.xpose.msra.mxu0 0.0
    %536 = vmatprep.subr.mxu0 0.0
    %537 = vmatpush2.xpose.msra.mxu0 0.0
    %538 = vmatprep.subr.mxu0 0.0
    %539 = vmatpush2.xpose.msra.mxu0 0.0
    %540 = vmatprep.subr.mxu0 0.0
    %541 = vmatpush2.xpose.msra.mxu0 0.0
    %542 = vmatprep.subr.mxu0 0.0
    %543 = vmatpush2.xpose.msra.mxu0 0.0
    %544 = vmatprep.subr.mxu0 0.0
    %545 = vmatpush2.xpose.msra.mxu0 0.0
    %546 = vmatprep.subr.mxu0 0.0
    %547 = vmatpush2.xpose.msra.mxu0 0.0
    %548 = vmatprep.subr.mxu0 0.0
    %549 = vmatpush2.xpose.msra.mxu0 0.0
    %550 = vmatprep.subr.mxu0 0.0
    %551 = vmatpush2.xpose.msra.mxu0 0.0
    %552 = vmatprep.subr.mxu0 0.0
    %553 = vmatpush2.xpose.msra.mxu0 0.0
    %554 = vmatprep.subr.mxu0 0.0
    %555 = vmatpush2.xpose.msra.mxu0 0.0
    %556 = vmatprep.mubr.f32.mxu0 %v345
    %557 = vmatmul.mubr.f32.gmra.mxu0 %v344
    %v558 = vpop.f32.mrf.mxu0
    %v559 = vadd.f32 0.0, %v558
    %v560 = vpop.f32.mrf.mxu0
    %561 = vdwg.mxu0
    %562 = vmatprep.subr.mxu0 0.0
    %563 = vmatpush1.xpose.msra.mxu0 0.0
    %564 = vmatprep.subr.mxu0 0.0
    %565 = vmatpush1.xpose.msra.mxu0 0.0
    %566 = vmatprep.subr.mxu0 0.0
    %567 = vmatpush1.xpose.msra.mxu0 0.0
    %568 = vmatprep.subr.mxu0 0.0
    %569 = vmatpush1.xpose.msra.mxu0 0.0
    %570 = vmatprep.subr.mxu0 0.0
    %571 = vmatpush1.xpose.msra.mxu0 0.0
    %572 = vmatprep.subr.mxu0 0.0
    %573 = vmatpush1.xpose.msra.mxu0 0.0
    %574 = vmatprep.subr.mxu0 0.0
    %575 = vmatpush1.xpose.msra.mxu0 0.0
    %576 = vmatprep.subr.mxu0 0.0
    %577 = vmatpush1.xpose.msra.mxu0 0.0
    %578 = vmatprep.subr.mxu0 0.0
    %579 = vmatpush1.xpose.msra.mxu0 0.0
    %580 = vmatprep.subr.mxu0 0.0
    %581 = vmatpush1.xpose.msra.mxu0 0.0
    %582 = vmatprep.subr.mxu0 0.0
    %583 = vmatpush1.xpose.msra.mxu0 0.0
    %584 = vmatprep.subr.mxu0 0.0
    %585 = vmatpush1.xpose.msra.mxu0 0.0
    %586 = vmatprep.subr.mxu0 0.0
    %587 = vmatpush1.xpose.msra.mxu0 0.0
    %588 = vmatprep.subr.mxu0 0.0
    %589 = vmatpush1.xpose.msra.mxu0 0.0
    %590 = vmatprep.subr.mxu0 0.0
    %591 = vmatpush1.xpose.msra.mxu0 0.0
    %592 = vmatprep.subr.mxu0 %v347
    %593 = vmatpush1.xpose.msra.mxu0 %v346
    %594 = vmatprep.subr.mxu0 0.0
    %595 = vmatpush2.xpose.msra.mxu0 0.0
    %596 = vmatprep.subr.mxu0 0.0
    %597 = vmatpush2.xpose.msra.mxu0 0.0
    %598 = vmatprep.subr.mxu0 0.0
    %599 = vmatpush2.xpose.msra.mxu0 0.0
    %600 = vmatprep.subr.mxu0 0.0
    %601 = vmatpush2.xpose.msra.mxu0 0.0
    %602 = vmatprep.subr.mxu0 0.0
    %603 = vmatpush2.xpose.msra.mxu0 0.0
    %604 = vmatprep.subr.mxu0 0.0
    %605 = vmatpush2.xpose.msra.mxu0 0.0
    %606 = vmatprep.subr.mxu0 0.0
    %607 = vmatpush2.xpose.msra.mxu0 0.0
    %608 = vmatprep.subr.mxu0 0.0
    %609 = vmatpush2.xpose.msra.mxu0 0.0
    %610 = vmatprep.subr.mxu0 0.0
    %611 = vmatpush2.xpose.msra.mxu0 0.0
    %612 = vmatprep.subr.mxu0 0.0
    %613 = vmatpush2.xpose.msra.mxu0 0.0
    %614 = vmatprep.subr.mxu0 0.0
    %615 = vmatpush2.xpose.msra.mxu0 0.0
    %616 = vmatprep.subr.mxu0 0.0
    %617 = vmatpush2.xpose.msra.mxu0 0.0
    %618 = vmatprep.subr.mxu0 0.0
    %619 = vmatpush2.xpose.msra.mxu0 0.0
    %620 = vmatprep.subr.mxu0 0.0
    %621 = vmatpush2.xpose.msra.mxu0 0.0
    %622 = vmatprep.subr.mxu0 0.0
    %623 = vmatpush2.xpose.msra.mxu0 0.0
    %624 = vmatprep.subr.mxu0 0.0
    %625 = vmatpush2.xpose.msra.mxu0 0.0
    %626 = vmatprep.mubr.f32.mxu0 %v347
    %627 = vmatmul.mubr.f32.gmra.mxu0 %v346
    %v628 = vpop.f32.mrf.mxu0
    %v629 = vadd.f32 %v559, %v628
    %v630 = vpop.f32.mrf.mxu0
    %631 = vdwg.mxu0
    %v632 = vadd.f32 %v491, %v629
    %633 = vst.msk [vmem:[#allocation3] sm:$0xff] %vm193, %v632
    %s634 = scalar_lea.vmem [#allocation4], 64
    %v635 = vld [vmem:[%s634] sm:$0xff]
    %v636 = vld [vmem:[%s634 + $0x8] sm:$0xff]
    %v637 = vld [vmem:[%s634 + $0x10] sm:$0xff]
    %v638 = vld [vmem:[%s634 + $0x18] sm:$0xff]
    %s639 = scalar_lea.vmem [#allocation7], 64
    %v640 = vld [vmem:[%s639] sm:$0xff]
    %v641 = vld [vmem:[%s639 + $0x8] sm:$0xff]
    %v642 = vld [vmem:[%s639 + $0x10] sm:$0xff]
    %v643 = vld [vmem:[%s639 + $0x18] sm:$0xff]
    %v644 = vld [vmem:[#allocation2] sm:$0xff]
    %645 = vmatprep.subr.mxu0 0.0
    %646 = vmatpush1.xpose.msra.mxu0 0.0
    %647 = vmatprep.subr.mxu0 0.0
    %648 = vmatpush1.xpose.msra.mxu0 0.0
    %649 = vmatprep.subr.mxu0 0.0
    %650 = vmatpush1.xpose.msra.mxu0 0.0
    %651 = vmatprep.subr.mxu0 0.0
    %652 = vmatpush1.xpose.msra.mxu0 0.0
    %653 = vmatprep.subr.mxu0 0.0
    %654 = vmatpush1.xpose.msra.mxu0 0.0
    %655 = vmatprep.subr.mxu0 0.0
    %656 = vmatpush1.xpose.msra.mxu0 0.0
    %657 = vmatprep.subr.mxu0 0.0
    %658 = vmatpush1.xpose.msra.mxu0 0.0
    %659 = vmatprep.subr.mxu0 0.0
    %660 = vmatpush1.xpose.msra.mxu0 0.0
    %661 = vmatprep.subr.mxu0 0.0
    %662 = vmatpush1.xpose.msra.mxu0 0.0
    %663 = vmatprep.subr.mxu0 0.0
    %664 = vmatpush1.xpose.msra.mxu0 0.0
    %665 = vmatprep.subr.mxu0 0.0
    %666 = vmatpush1.xpose.msra.mxu0 0.0
    %667 = vmatprep.subr.mxu0 0.0
    %668 = vmatpush1.xpose.msra.mxu0 0.0
    %669 = vmatprep.subr.mxu0 0.0
    %670 = vmatpush1.xpose.msra.mxu0 0.0
    %671 = vmatprep.subr.mxu0 0.0
    %672 = vmatpush1.xpose.msra.mxu0 0.0
    %673 = vmatprep.subr.mxu0 0.0
    %674 = vmatpush1.xpose.msra.mxu0 0.0
    %675 = vmatprep.subr.mxu0 %v636
    %676 = vmatpush1.xpose.msra.mxu0 %v635
    %677 = vmatprep.subr.mxu0 0.0
    %678 = vmatpush2.xpose.msra.mxu0 0.0
    %679 = vmatprep.subr.mxu0 0.0
    %680 = vmatpush2.xpose.msra.mxu0 0.0
    %681 = vmatprep.subr.mxu0 0.0
    %682 = vmatpush2.xpose.msra.mxu0 0.0
    %683 = vmatprep.subr.mxu0 0.0
    %684 = vmatpush2.xpose.msra.mxu0 0.0
    %685 = vmatprep.subr.mxu0 0.0
    %686 = vmatpush2.xpose.msra.mxu0 0.0
    %687 = vmatprep.subr.mxu0 0.0
    %688 = vmatpush2.xpose.msra.mxu0 0.0
    %689 = vmatprep.subr.mxu0 0.0
    %690 = vmatpush2.xpose.msra.mxu0 0.0
    %691 = vmatprep.subr.mxu0 0.0
    %692 = vmatpush2.xpose.msra.mxu0 0.0
    %693 = vmatprep.subr.mxu0 0.0
    %694 = vmatpush2.xpose.msra.mxu0 0.0
    %695 = vmatprep.subr.mxu0 0.0
    %696 = vmatpush2.xpose.msra.mxu0 0.0
    %697 = vmatprep.subr.mxu0 0.0
    %698 = vmatpush2.xpose.msra.mxu0 0.0
    %699 = vmatprep.subr.mxu0 0.0
    %700 = vmatpush2.xpose.msra.mxu0 0.0
    %701 = vmatprep.subr.mxu0 0.0
    %702 = vmatpush2.xpose.msra.mxu0 0.0
    %703 = vmatprep.subr.mxu0 0.0
    %704 = vmatpush2.xpose.msra.mxu0 0.0
    %705 = vmatprep.subr.mxu0 0.0
    %706 = vmatpush2.xpose.msra.mxu0 0.0
    %707 = vmatprep.subr.mxu0 0.0
    %708 = vmatpush2.xpose.msra.mxu0 0.0
    %709 = vmatprep.mubr.f32.mxu0 %v636
    %710 = vmatmul.mubr.f32.gmra.mxu0 %v635
    %v711 = vpop.f32.mrf.mxu0
    %v712 = vadd.f32 0.0, %v711
    %v713 = vpop.f32.mrf.mxu0
    %714 = vdwg.mxu0
    %715 = vmatprep.subr.mxu0 0.0
    %716 = vmatpush1.xpose.msra.mxu0 0.0
    %717 = vmatprep.subr.mxu0 0.0
    %718 = vmatpush1.xpose.msra.mxu0 0.0
    %719 = vmatprep.subr.mxu0 0.0
    %720 = vmatpush1.xpose.msra.mxu0 0.0
    %721 = vmatprep.subr.mxu0 0.0
    %722 = vmatpush1.xpose.msra.mxu0 0.0
    %723 = vmatprep.subr.mxu0 0.0
    %724 = vmatpush1.xpose.msra.mxu0 0.0
    %725 = vmatprep.subr.mxu0 0.0
    %726 = vmatpush1.xpose.msra.mxu0 0.0
    %727 = vmatprep.subr.mxu0 0.0
    %728 = vmatpush1.xpose.msra.mxu0 0.0
    %729 = vmatprep.subr.mxu0 0.0
    %730 = vmatpush1.xpose.msra.mxu0 0.0
    %731 = vmatprep.subr.mxu0 0.0
    %732 = vmatpush1.xpose.msra.mxu0 0.0
    %733 = vmatprep.subr.mxu0 0.0
    %734 = vmatpush1.xpose.msra.mxu0 0.0
    %735 = vmatprep.subr.mxu0 0.0
    %736 = vmatpush1.xpose.msra.mxu0 0.0
    %737 = vmatprep.subr.mxu0 0.0
    %738 = vmatpush1.xpose.msra.mxu0 0.0
    %739 = vmatprep.subr.mxu0 0.0
    %740 = vmatpush1.xpose.msra.mxu0 0.0
    %741 = vmatprep.subr.mxu0 0.0
    %742 = vmatpush1.xpose.msra.mxu0 0.0
    %743 = vmatprep.subr.mxu0 0.0
    %744 = vmatpush1.xpose.msra.mxu0 0.0
    %745 = vmatprep.subr.mxu0 %v638
    %746 = vmatpush1.xpose.msra.mxu0 %v637
    %747 = vmatprep.subr.mxu0 0.0
    %748 = vmatpush2.xpose.msra.mxu0 0.0
    %749 = vmatprep.subr.mxu0 0.0
    %750 = vmatpush2.xpose.msra.mxu0 0.0
    %751 = vmatprep.subr.mxu0 0.0
    %752 = vmatpush2.xpose.msra.mxu0 0.0
    %753 = vmatprep.subr.mxu0 0.0
    %754 = vmatpush2.xpose.msra.mxu0 0.0
    %755 = vmatprep.subr.mxu0 0.0
    %756 = vmatpush2.xpose.msra.mxu0 0.0
    %757 = vmatprep.subr.mxu0 0.0
    %758 = vmatpush2.xpose.msra.mxu0 0.0
    %759 = vmatprep.subr.mxu0 0.0
    %760 = vmatpush2.xpose.msra.mxu0 0.0
    %761 = vmatprep.subr.mxu0 0.0
    %762 = vmatpush2.xpose.msra.mxu0 0.0
    %763 = vmatprep.subr.mxu0 0.0
    %764 = vmatpush2.xpose.msra.mxu0 0.0
    %765 = vmatprep.subr.mxu0 0.0
    %766 = vmatpush2.xpose.msra.mxu0 0.0
    %767 = vmatprep.subr.mxu0 0.0
    %768 = vmatpush2.xpose.msra.mxu0 0.0
    %769 = vmatprep.subr.mxu0 0.0
    %770 = vmatpush2.xpose.msra.mxu0 0.0
    %771 = vmatprep.subr.mxu0 0.0
    %772 = vmatpush2.xpose.msra.mxu0 0.0
    %773 = vmatprep.subr.mxu0 0.0
    %774 = vmatpush2.xpose.msra.mxu0 0.0
    %775 = vmatprep.subr.mxu0 0.0
    %776 = vmatpush2.xpose.msra.mxu0 0.0
    %777 = vmatprep.subr.mxu0 0.0
    %778 = vmatpush2.xpose.msra.mxu0 0.0
    %779 = vmatprep.mubr.f32.mxu0 %v638
    %780 = vmatmul.mubr.f32.gmra.mxu0 %v637
    %v781 = vpop.f32.mrf.mxu0
    %v782 = vadd.f32 %v712, %v781
    %v783 = vpop.f32.mrf.mxu0
    %784 = vdwg.mxu0
    %v785 = vadd.f32 %v644, %v782
    %786 = vst.msk [vmem:[#allocation2] sm:$0xff] %vm193, %v785
    %v787 = vld [vmem:[#allocation3] sm:$0xff]
    %788 = vmatprep.subr.mxu0 0.0
    %789 = vmatpush1.xpose.msra.mxu0 0.0
    %790 = vmatprep.subr.mxu0 0.0
    %791 = vmatpush1.xpose.msra.mxu0 0.0
    %792 = vmatprep.subr.mxu0 0.0
    %793 = vmatpush1.xpose.msra.mxu0 0.0
    %794 = vmatprep.subr.mxu0 0.0
    %795 = vmatpush1.xpose.msra.mxu0 0.0
    %796 = vmatprep.subr.mxu0 0.0
    %797 = vmatpush1.xpose.msra.mxu0 0.0
    %798 = vmatprep.subr.mxu0 0.0
    %799 = vmatpush1.xpose.msra.mxu0 0.0
    %800 = vmatprep.subr.mxu0 0.0
    %801 = vmatpush1.xpose.msra.mxu0 0.0
    %802 = vmatprep.subr.mxu0 0.0
    %803 = vmatpush1.xpose.msra.mxu0 0.0
    %804 = vmatprep.subr.mxu0 0.0
    %805 = vmatpush1.xpose.msra.mxu0 0.0
    %806 = vmatprep.subr.mxu0 0.0
    %807 = vmatpush1.xpose.msra.mxu0 0.0
    %808 = vmatprep.subr.mxu0 0.0
    %809 = vmatpush1.xpose.msra.mxu0 0.0
    %810 = vmatprep.subr.mxu0 0.0
    %811 = vmatpush1.xpose.msra.mxu0 0.0
    %812 = vmatprep.subr.mxu0 0.0
    %813 = vmatpush1.xpose.msra.mxu0 0.0
    %814 = vmatprep.subr.mxu0 0.0
    %815 = vmatpush1.xpose.msra.mxu0 0.0
    %816 = vmatprep.subr.mxu0 0.0
    %817 = vmatpush1.xpose.msra.mxu0 0.0
    %818 = vmatprep.subr.mxu0 %v641
    %819 = vmatpush1.xpose.msra.mxu0 %v640
    %820 = vmatprep.subr.mxu0 0.0
    %821 = vmatpush2.xpose.msra.mxu0 0.0
    %822 = vmatprep.subr.mxu0 0.0
    %823 = vmatpush2.xpose.msra.mxu0 0.0
    %824 = vmatprep.subr.mxu0 0.0
    %825 = vmatpush2.xpose.msra.mxu0 0.0
    %826 = vmatprep.subr.mxu0 0.0
    %827 = vmatpush2.xpose.msra.mxu0 0.0
    %828 = vmatprep.subr.mxu0 0.0
    %829 = vmatpush2.xpose.msra.mxu0 0.0
    %830 = vmatprep.subr.mxu0 0.0
    %831 = vmatpush2.xpose.msra.mxu0 0.0
    %832 = vmatprep.subr.mxu0 0.0
    %833 = vmatpush2.xpose.msra.mxu0 0.0
    %834 = vmatprep.subr.mxu0 0.0
    %835 = vmatpush2.xpose.msra.mxu0 0.0
    %836 = vmatprep.subr.mxu0 0.0
    %837 = vmatpush2.xpose.msra.mxu0 0.0
    %838 = vmatprep.subr.mxu0 0.0
    %839 = vmatpush2.xpose.msra.mxu0 0.0
    %840 = vmatprep.subr.mxu0 0.0
    %841 = vmatpush2.xpose.msra.mxu0 0.0
    %842 = vmatprep.subr.mxu0 0.0
    %843 = vmatpush2.xpose.msra.mxu0 0.0
    %844 = vmatprep.subr.mxu0 0.0
    %845 = vmatpush2.xpose.msra.mxu0 0.0
    %846 = vmatprep.subr.mxu0 0.0
    %847 = vmatpush2.xpose.msra.mxu0 0.0
    %848 = vmatprep.subr.mxu0 0.0
    %849 = vmatpush2.xpose.msra.mxu0 0.0
    %850 = vmatprep.subr.mxu0 0.0
    %851 = vmatpush2.xpose.msra.mxu0 0.0
    %852 = vmatprep.mubr.f32.mxu0 %v641
    %853 = vmatmul.mubr.f32.gmra.mxu0 %v640
    %v854 = vpop.f32.mrf.mxu0
    %v855 = vadd.f32 0.0, %v854
    %v856 = vpop.f32.mrf.mxu0
    %857 = vdwg.mxu0
    %858 = vmatprep.subr.mxu0 0.0
    %859 = vmatpush1.xpose.msra.mxu0 0.0
    %860 = vmatprep.subr.mxu0 0.0
    %861 = vmatpush1.xpose.msra.mxu0 0.0
    %862 = vmatprep.subr.mxu0 0.0
    %863 = vmatpush1.xpose.msra.mxu0 0.0
    %864 = vmatprep.subr.mxu0 0.0
    %865 = vmatpush1.xpose.msra.mxu0 0.0
    %866 = vmatprep.subr.mxu0 0.0
    %867 = vmatpush1.xpose.msra.mxu0 0.0
    %868 = vmatprep.subr.mxu0 0.0
    %869 = vmatpush1.xpose.msra.mxu0 0.0
    %870 = vmatprep.subr.mxu0 0.0
    %871 = vmatpush1.xpose.msra.mxu0 0.0
    %872 = vmatprep.subr.mxu0 0.0
    %873 = vmatpush1.xpose.msra.mxu0 0.0
    %874 = vmatprep.subr.mxu0 0.0
    %875 = vmatpush1.xpose.msra.mxu0 0.0
    %876 = vmatprep.subr.mxu0 0.0
    %877 = vmatpush1.xpose.msra.mxu0 0.0
    %878 = vmatprep.subr.mxu0 0.0
    %879 = vmatpush1.xpose.msra.mxu0 0.0
    %880 = vmatprep.subr.mxu0 0.0
    %881 = vmatpush1.xpose.msra.mxu0 0.0
    %882 = vmatprep.subr.mxu0 0.0
    %883 = vmatpush1.xpose.msra.mxu0 0.0
    %884 = vmatprep.subr.mxu0 0.0
    %885 = vmatpush1.xpose.msra.mxu0 0.0
    %886 = vmatprep.subr.mxu0 0.0
    %887 = vmatpush1.xpose.msra.mxu0 0.0
    %888 = vmatprep.subr.mxu0 %v643
    %889 = vmatpush1.xpose.msra.mxu0 %v642
    %890 = vmatprep.subr.mxu0 0.0
    %891 = vmatpush2.xpose.msra.mxu0 0.0
    %892 = vmatprep.subr.mxu0 0.0
    %893 = vmatpush2.xpose.msra.mxu0 0.0
    %894 = vmatprep.subr.mxu0 0.0
    %895 = vmatpush2.xpose.msra.mxu0 0.0
    %896 = vmatprep.subr.mxu0 0.0
    %897 = vmatpush2.xpose.msra.mxu0 0.0
    %898 = vmatprep.subr.mxu0 0.0
    %899 = vmatpush2.xpose.msra.mxu0 0.0
    %900 = vmatprep.subr.mxu0 0.0
    %901 = vmatpush2.xpose.msra.mxu0 0.0
    %902 = vmatprep.subr.mxu0 0.0
    %903 = vmatpush2.xpose.msra.mxu0 0.0
    %904 = vmatprep.subr.mxu0 0.0
    %905 = vmatpush2.xpose.msra.mxu0 0.0
    %906 = vmatprep.subr.mxu0 0.0
    %907 = vmatpush2.xpose.msra.mxu0 0.0
    %908 = vmatprep.subr.mxu0 0.0
    %909 = vmatpush2.xpose.msra.mxu0 0.0
    %910 = vmatprep.subr.mxu0 0.0
    %911 = vmatpush2.xpose.msra.mxu0 0.0
    %912 = vmatprep.subr.mxu0 0.0
    %913 = vmatpush2.xpose.msra.mxu0 0.0
    %914 = vmatprep.subr.mxu0 0.0
    %915 = vmatpush2.xpose.msra.mxu0 0.0
    %916 = vmatprep.subr.mxu0 0.0
    %917 = vmatpush2.xpose.msra.mxu0 0.0
    %918 = vmatprep.subr.mxu0 0.0
    %919 = vmatpush2.xpose.msra.mxu0 0.0
    %920 = vmatprep.subr.mxu0 0.0
    %921 = vmatpush2.xpose.msra.mxu0 0.0
    %922 = vmatprep.mubr.f32.mxu0 %v643
    %923 = vmatmul.mubr.f32.gmra.mxu0 %v642
    %v924 = vpop.f32.mrf.mxu0
    %v925 = vadd.f32 %v855, %v924
    %v926 = vpop.f32.mrf.mxu0
    %927 = vdwg.mxu0
    %v928 = vadd.f32 %v787, %v925
    %929 = vst.msk [vmem:[#allocation3] sm:$0xff] %vm193, %v928
    %s930 = scalar_lea.vmem [#allocation4], 96
    %v931 = vld [vmem:[%s930] sm:$0xff]
    %v932 = vld [vmem:[%s930 + $0x8] sm:$0xff]
    %v933 = vld [vmem:[%s930 + $0x10] sm:$0xff]
    %v934 = vld [vmem:[%s930 + $0x18] sm:$0xff]
    %s935 = scalar_lea.vmem [#allocation7], 96
    %v936 = vld [vmem:[%s935] sm:$0xff]
    %v937 = vld [vmem:[%s935 + $0x8] sm:$0xff]
    %v938 = vld [vmem:[%s935 + $0x10] sm:$0xff]
    %v939 = vld [vmem:[%s935 + $0x18] sm:$0xff]
    %v940 = vld [vmem:[#allocation2] sm:$0xff]
    %941 = vmatprep.subr.mxu0 0.0
    %942 = vmatpush1.xpose.msra.mxu0 0.0
    %943 = vmatprep.subr.mxu0 0.0
    %944 = vmatpush1.xpose.msra.mxu0 0.0
    %945 = vmatprep.subr.mxu0 0.0
    %946 = vmatpush1.xpose.msra.mxu0 0.0
    %947 = vmatprep.subr.mxu0 0.0
    %948 = vmatpush1.xpose.msra.mxu0 0.0
    %949 = vmatprep.subr.mxu0 0.0
    %950 = vmatpush1.xpose.msra.mxu0 0.0
    %951 = vmatprep.subr.mxu0 0.0
    %952 = vmatpush1.xpose.msra.mxu0 0.0
    %953 = vmatprep.subr.mxu0 0.0
    %954 = vmatpush1.xpose.msra.mxu0 0.0
    %955 = vmatprep.subr.mxu0 0.0
    %956 = vmatpush1.xpose.msra.mxu0 0.0
    %957 = vmatprep.subr.mxu0 0.0
    %958 = vmatpush1.xpose.msra.mxu0 0.0
    %959 = vmatprep.subr.mxu0 0.0
    %960 = vmatpush1.xpose.msra.mxu0 0.0
    %961 = vmatprep.subr.mxu0 0.0
    %962 = vmatpush1.xpose.msra.mxu0 0.0
    %963 = vmatprep.subr.mxu0 0.0
    %964 = vmatpush1.xpose.msra.mxu0 0.0
    %965 = vmatprep.subr.mxu0 0.0
    %966 = vmatpush1.xpose.msra.mxu0 0.0
    %967 = vmatprep.subr.mxu0 0.0
    %968 = vmatpush1.xpose.msra.mxu0 0.0
    %969 = vmatprep.subr.mxu0 0.0
    %970 = vmatpush1.xpose.msra.mxu0 0.0
    %971 = vmatprep.subr.mxu0 %v932
    %972 = vmatpush1.xpose.msra.mxu0 %v931
    %973 = vmatprep.subr.mxu0 0.0
    %974 = vmatpush2.xpose.msra.mxu0 0.0
    %975 = vmatprep.subr.mxu0 0.0
    %976 = vmatpush2.xpose.msra.mxu0 0.0
    %977 = vmatprep.subr.mxu0 0.0
    %978 = vmatpush2.xpose.msra.mxu0 0.0
    %979 = vmatprep.subr.mxu0 0.0
    %980 = vmatpush2.xpose.msra.mxu0 0.0
    %981 = vmatprep.subr.mxu0 0.0
    %982 = vmatpush2.xpose.msra.mxu0 0.0
    %983 = vmatprep.subr.mxu0 0.0
    %984 = vmatpush2.xpose.msra.mxu0 0.0
    %985 = vmatprep.subr.mxu0 0.0
    %986 = vmatpush2.xpose.msra.mxu0 0.0
    %987 = vmatprep.subr.mxu0 0.0
    %988 = vmatpush2.xpose.msra.mxu0 0.0
    %989 = vmatprep.subr.mxu0 0.0
    %990 = vmatpush2.xpose.msra.mxu0 0.0
    %991 = vmatprep.subr.mxu0 0.0
    %992 = vmatpush2.xpose.msra.mxu0 0.0
    %993 = vmatprep.subr.mxu0 0.0
    %994 = vmatpush2.xpose.msra.mxu0 0.0
    %995 = vmatprep.subr.mxu0 0.0
    %996 = vmatpush2.xpose.msra.mxu0 0.0
    %997 = vmatprep.subr.mxu0 0.0
    %998 = vmatpush2.xpose.msra.mxu0 0.0
    %999 = vmatprep.subr.mxu0 0.0
    %1000 = vmatpush2.xpose.msra.mxu0 0.0
    %1001 = vmatprep.subr.mxu0 0.0
    %1002 = vmatpush2.xpose.msra.mxu0 0.0
    %1003 = vmatprep.subr.mxu0 0.0
    %1004 = vmatpush2.xpose.msra.mxu0 0.0
    %1005 = vmatprep.mubr.f32.mxu0 %v932
    %1006 = vmatmul.mubr.f32.gmra.mxu0 %v931
    %v1007 = vpop.f32.mrf.mxu0
    %v1008 = vadd.f32 0.0, %v1007
    %v1009 = vpop.f32.mrf.mxu0
    %1010 = vdwg.mxu0
    %1011 = vmatprep.subr.mxu0 0.0
    %1012 = vmatpush1.xpose.msra.mxu0 0.0
    %1013 = vmatprep.subr.mxu0 0.0
    %1014 = vmatpush1.xpose.msra.mxu0 0.0
    %1015 = vmatprep.subr.mxu0 0.0
    %1016 = vmatpush1.xpose.msra.mxu0 0.0
    %1017 = vmatprep.subr.mxu0 0.0
    %1018 = vmatpush1.xpose.msra.mxu0 0.0
    %1019 = vmatprep.subr.mxu0 0.0
    %1020 = vmatpush1.xpose.msra.mxu0 0.0
    %1021 = vmatprep.subr.mxu0 0.0
    %1022 = vmatpush1.xpose.msra.mxu0 0.0
    %1023 = vmatprep.subr.mxu0 0.0
    %1024 = vmatpush1.xpose.msra.mxu0 0.0
    %1025 = vmatprep.subr.mxu0 0.0
    %1026 = vmatpush1.xpose.msra.mxu0 0.0
    %1027 = vmatprep.subr.mxu0 0.0
    %1028 = vmatpush1.xpose.msra.mxu0 0.0
    %1029 = vmatprep.subr.mxu0 0.0
    %1030 = vmatpush1.xpose.msra.mxu0 0.0
    %1031 = vmatprep.subr.mxu0 0.0
    %1032 = vmatpush1.xpose.msra.mxu0 0.0
    %1033 = vmatprep.subr.mxu0 0.0
    %1034 = vmatpush1.xpose.msra.mxu0 0.0
    %1035 = vmatprep.subr.mxu0 0.0
    %1036 = vmatpush1.xpose.msra.mxu0 0.0
    %1037 = vmatprep.subr.mxu0 0.0
    %1038 = vmatpush1.xpose.msra.mxu0 0.0
    %1039 = vmatprep.subr.mxu0 0.0
    %1040 = vmatpush1.xpose.msra.mxu0 0.0
    %1041 = vmatprep.subr.mxu0 %v934
    %1042 = vmatpush1.xpose.msra.mxu0 %v933
    %1043 = vmatprep.subr.mxu0 0.0
    %1044 = vmatpush2.xpose.msra.mxu0 0.0
    %1045 = vmatprep.subr.mxu0 0.0
    %1046 = vmatpush2.xpose.msra.mxu0 0.0
    %1047 = vmatprep.subr.mxu0 0.0
    %1048 = vmatpush2.xpose.msra.mxu0 0.0
    %1049 = vmatprep.subr.mxu0 0.0
    %1050 = vmatpush2.xpose.msra.mxu0 0.0
    %1051 = vmatprep.subr.mxu0 0.0
    %1052 = vmatpush2.xpose.msra.mxu0 0.0
    %1053 = vmatprep.subr.mxu0 0.0
    %1054 = vmatpush2.xpose.msra.mxu0 0.0
    %1055 = vmatprep.subr.mxu0 0.0
    %1056 = vmatpush2.xpose.msra.mxu0 0.0
    %1057 = vmatprep.subr.mxu0 0.0
    %1058 = vmatpush2.xpose.msra.mxu0 0.0
    %1059 = vmatprep.subr.mxu0 0.0
    %1060 = vmatpush2.xpose.msra.mxu0 0.0
    %1061 = vmatprep.subr.mxu0 0.0
    %1062 = vmatpush2.xpose.msra.mxu0 0.0
    %1063 = vmatprep.subr.mxu0 0.0
    %1064 = vmatpush2.xpose.msra.mxu0 0.0
    %1065 = vmatprep.subr.mxu0 0.0
    %1066 = vmatpush2.xpose.msra.mxu0 0.0
    %1067 = vmatprep.subr.mxu0 0.0
    %1068 = vmatpush2.xpose.msra.mxu0 0.0
    %1069 = vmatprep.subr.mxu0 0.0
    %1070 = vmatpush2.xpose.msra.mxu0 0.0
    %1071 = vmatprep.subr.mxu0 0.0
    %1072 = vmatpush2.xpose.msra.mxu0 0.0
    %1073 = vmatprep.subr.mxu0 0.0
    %1074 = vmatpush2.xpose.msra.mxu0 0.0
    %1075 = vmatprep.mubr.f32.mxu0 %v934
    %1076 = vmatmul.mubr.f32.gmra.mxu0 %v933
    %v1077 = vpop.f32.mrf.mxu0
    %v1078 = vadd.f32 %v1008, %v1077
    %v1079 = vpop.f32.mrf.mxu0
    %1080 = vdwg.mxu0
    %v1081 = vadd.f32 %v940, %v1078
    %1082 = vst.msk [vmem:[#allocation2] sm:$0xff] %vm193, %v1081
    %v1083 = vld [vmem:[#allocation3] sm:$0xff]
    %1084 = vmatprep.subr.mxu0 0.0
    %1085 = vmatpush1.xpose.msra.mxu0 0.0
    %1086 = vmatprep.subr.mxu0 0.0
    %1087 = vmatpush1.xpose.msra.mxu0 0.0
    %1088 = vmatprep.subr.mxu0 0.0
    %1089 = vmatpush1.xpose.msra.mxu0 0.0
    %1090 = vmatprep.subr.mxu0 0.0
    %1091 = vmatpush1.xpose.msra.mxu0 0.0
    %1092 = vmatprep.subr.mxu0 0.0
    %1093 = vmatpush1.xpose.msra.mxu0 0.0
    %1094 = vmatprep.subr.mxu0 0.0
    %1095 = vmatpush1.xpose.msra.mxu0 0.0
    %1096 = vmatprep.subr.mxu0 0.0
    %1097 = vmatpush1.xpose.msra.mxu0 0.0
    %1098 = vmatprep.subr.mxu0 0.0
    %1099 = vmatpush1.xpose.msra.mxu0 0.0
    %1100 = vmatprep.subr.mxu0 0.0
    %1101 = vmatpush1.xpose.msra.mxu0 0.0
    %1102 = vmatprep.subr.mxu0 0.0
    %1103 = vmatpush1.xpose.msra.mxu0 0.0
    %1104 = vmatprep.subr.mxu0 0.0
    %1105 = vmatpush1.xpose.msra.mxu0 0.0
    %1106 = vmatprep.subr.mxu0 0.0
    %1107 = vmatpush1.xpose.msra.mxu0 0.0
    %1108 = vmatprep.subr.mxu0 0.0
    %1109 = vmatpush1.xpose.msra.mxu0 0.0
    %1110 = vmatprep.subr.mxu0 0.0
    %1111 = vmatpush1.xpose.msra.mxu0 0.0
    %1112 = vmatprep.subr.mxu0 0.0
    %1113 = vmatpush1.xpose.msra.mxu0 0.0
    %1114 = vmatprep.subr.mxu0 %v937
    %1115 = vmatpush1.xpose.msra.mxu0 %v936
    %1116 = vmatprep.subr.mxu0 0.0
    %1117 = vmatpush2.xpose.msra.mxu0 0.0
    %1118 = vmatprep.subr.mxu0 0.0
    %1119 = vmatpush2.xpose.msra.mxu0 0.0
    %1120 = vmatprep.subr.mxu0 0.0
    %1121 = vmatpush2.xpose.msra.mxu0 0.0
    %1122 = vmatprep.subr.mxu0 0.0
    %1123 = vmatpush2.xpose.msra.mxu0 0.0
    %1124 = vmatprep.subr.mxu0 0.0
    %1125 = vmatpush2.xpose.msra.mxu0 0.0
    %1126 = vmatprep.subr.mxu0 0.0
    %1127 = vmatpush2.xpose.msra.mxu0 0.0
    %1128 = vmatprep.subr.mxu0 0.0
    %1129 = vmatpush2.xpose.msra.mxu0 0.0
    %1130 = vmatprep.subr.mxu0 0.0
    %1131 = vmatpush2.xpose.msra.mxu0 0.0
    %1132 = vmatprep.subr.mxu0 0.0
    %1133 = vmatpush2.xpose.msra.mxu0 0.0
    %1134 = vmatprep.subr.mxu0 0.0
    %1135 = vmatpush2.xpose.msra.mxu0 0.0
    %1136 = vmatprep.subr.mxu0 0.0
    %1137 = vmatpush2.xpose.msra.mxu0 0.0
    %1138 = vmatprep.subr.mxu0 0.0
    %1139 = vmatpush2.xpose.msra.mxu0 0.0
    %1140 = vmatprep.subr.mxu0 0.0
    %1141 = vmatpush2.xpose.msra.mxu0 0.0
    %1142 = vmatprep.subr.mxu0 0.0
    %1143 = vmatpush2.xpose.msra.mxu0 0.0
    %1144 = vmatprep.subr.mxu0 0.0
    %1145 = vmatpush2.xpose.msra.mxu0 0.0
    %1146 = vmatprep.subr.mxu0 0.0
    %1147 = vmatpush2.xpose.msra.mxu0 0.0
    %1148 = vmatprep.mubr.f32.mxu0 %v937
    %1149 = vmatmul.mubr.f32.gmra.mxu0 %v936
    %v1150 = vpop.f32.mrf.mxu0
    %v1151 = vadd.f32 0.0, %v1150
    %v1152 = vpop.f32.mrf.mxu0
    %1153 = vdwg.mxu0
    %1154 = vmatprep.subr.mxu0 0.0
    %1155 = vmatpush1.xpose.msra.mxu0 0.0
    %1156 = vmatprep.subr.mxu0 0.0
    %1157 = vmatpush1.xpose.msra.mxu0 0.0
    %1158 = vmatprep.subr.mxu0 0.0
    %1159 = vmatpush1.xpose.msra.mxu0 0.0
    %1160 = vmatprep.subr.mxu0 0.0
    %1161 = vmatpush1.xpose.msra.mxu0 0.0
    %1162 = vmatprep.subr.mxu0 0.0
    %1163 = vmatpush1.xpose.msra.mxu0 0.0
    %1164 = vmatprep.subr.mxu0 0.0
    %1165 = vmatpush1.xpose.msra.mxu0 0.0
    %1166 = vmatprep.subr.mxu0 0.0
    %1167 = vmatpush1.xpose.msra.mxu0 0.0
    %1168 = vmatprep.subr.mxu0 0.0
    %1169 = vmatpush1.xpose.msra.mxu0 0.0
    %1170 = vmatprep.subr.mxu0 0.0
    %1171 = vmatpush1.xpose.msra.mxu0 0.0
    %1172 = vmatprep.subr.mxu0 0.0
    %1173 = vmatpush1.xpose.msra.mxu0 0.0
    %1174 = vmatprep.subr.mxu0 0.0
    %1175 = vmatpush1.xpose.msra.mxu0 0.0
    %1176 = vmatprep.subr.mxu0 0.0
    %1177 = vmatpush1.xpose.msra.mxu0 0.0
    %1178 = vmatprep.subr.mxu0 0.0
    %1179 = vmatpush1.xpose.msra.mxu0 0.0
    %1180 = vmatprep.subr.mxu0 0.0
    %1181 = vmatpush1.xpose.msra.mxu0 0.0
    %1182 = vmatprep.subr.mxu0 0.0
    %1183 = vmatpush1.xpose.msra.mxu0 0.0
    %1184 = vmatprep.subr.mxu0 %v939
    %1185 = vmatpush1.xpose.msra.mxu0 %v938
    %1186 = vmatprep.subr.mxu0 0.0
    %1187 = vmatpush2.xpose.msra.mxu0 0.0
    %1188 = vmatprep.subr.mxu0 0.0
    %1189 = vmatpush2.xpose.msra.mxu0 0.0
    %1190 = vmatprep.subr.mxu0 0.0
    %1191 = vmatpush2.xpose.msra.mxu0 0.0
    %1192 = vmatprep.subr.mxu0 0.0
    %1193 = vmatpush2.xpose.msra.mxu0 0.0
    %1194 = vmatprep.subr.mxu0 0.0
    %1195 = vmatpush2.xpose.msra.mxu0 0.0
    %1196 = vmatprep.subr.mxu0 0.0
    %1197 = vmatpush2.xpose.msra.mxu0 0.0
    %1198 = vmatprep.subr.mxu0 0.0
    %1199 = vmatpush2.xpose.msra.mxu0 0.0
    %1200 = vmatprep.subr.mxu0 0.0
    %1201 = vmatpush2.xpose.msra.mxu0 0.0
    %1202 = vmatprep.subr.mxu0 0.0
    %1203 = vmatpush2.xpose.msra.mxu0 0.0
    %1204 = vmatprep.subr.mxu0 0.0
    %1205 = vmatpush2.xpose.msra.mxu0 0.0
    %1206 = vmatprep.subr.mxu0 0.0
    %1207 = vmatpush2.xpose.msra.mxu0 0.0
    %1208 = vmatprep.subr.mxu0 0.0
    %1209 = vmatpush2.xpose.msra.mxu0 0.0
    %1210 = vmatprep.subr.mxu0 0.0
    %1211 = vmatpush2.xpose.msra.mxu0 0.0
    %1212 = vmatprep.subr.mxu0 0.0
    %1213 = vmatpush2.xpose.msra.mxu0 0.0
    %1214 = vmatprep.subr.mxu0 0.0
    %1215 = vmatpush2.xpose.msra.mxu0 0.0
    %1216 = vmatprep.subr.mxu0 0.0
    %1217 = vmatpush2.xpose.msra.mxu0 0.0
    %1218 = vmatprep.mubr.f32.mxu0 %v939
    %1219 = vmatmul.mubr.f32.gmra.mxu0 %v938
    %v1220 = vpop.f32.mrf.mxu0
    %v1221 = vadd.f32 %v1151, %v1220
    %v1222 = vpop.f32.mrf.mxu0
    %1223 = vdwg.mxu0
    %v1224 = vadd.f32 %v1083, %v1221
    %1225 = vst.msk [vmem:[#allocation3] sm:$0xff] %vm193, %v1224
    // Predicated region
    $region22: #{tpu_custom_call.1} parent=1 // pred_check
      %p1226 = pneg %p36
    $region23: #{tpu_custom_call.1} parent=1 // pred_check_branch
      %1228 = sbr.rel (%p1226) target = $region25
    $region24: #{tpu_custom_call.1} parent=1 // pred_region
      %v1229 = vld [vmem:[#allocation2] sm:$0xff]
      %v1230 = vld [vmem:[#allocation3] sm:$0xff]
      %v1231 = vlaneseq
      %v1232 = vshrl.u32 %v1231, 7
      %v1233 = vlaneseq
      %v1234 = vand.u32 %v1233, 127
      %vm1235 = vcmp.eq.s32.totalorder %v1232, %v1234
      %v1236 = vsel %vm1235, %v1229, 0.0
      %v1237 = vsel %vm193, %v1236, 0.0
      %1238 = vadd.xlane.f32.xlu0 %v1237
      %v1239 = vpop.xlane.xlu0 %1238
      %v1240 = vrot.slane %v1237, 4
      %v1241 = vadd.f32 %v1237, %v1240
      %v1242 = vrot.slane %v1241, 2
      %v1243 = vadd.f32 %v1241, %v1242
      %v1244 = vrot.slane %v1243, 1
      %v1245 = vadd.f32 %v1243, %v1244
      %v1246 = vmax.f32 %v1239, 1e-24
      %v1247 = vrsqrt.pop %v1246
      %v1248 = vmax.f32 %v1245, 1e-24
      %v1249 = vrsqrt.pop %v1248
      %v1250 = vmul.f32 %v1229, %v1247
      %v1251 = vmul.f32 %v1250, %v1249
      %v1252 = vmul.f32 %v1251, 0.25
      %v1253 = vsel %vm1235, %v1230, 0.0
      %v1254 = vsel %vm193, %v1253, 0.0
      %1255 = vadd.xlane.f32.xlu0 %v1254
      %v1256 = vpop.xlane.xlu0 %1255
      %v1257 = vrot.slane %v1254, 4
      %v1258 = vadd.f32 %v1254, %v1257
      %v1259 = vrot.slane %v1258, 2
      %v1260 = vadd.f32 %v1258, %v1259
      %v1261 = vrot.slane %v1260, 1
      %v1262 = vadd.f32 %v1260, %v1261
      %v1263 = vmax.f32 %v1256, 1e-24
      %v1264 = vrsqrt.pop %v1263
      %v1265 = vmax.f32 %v1262, 1e-24
      %v1266 = vrsqrt.pop %v1265
      %v1267 = vmul.f32 %v1230, %v1264
      %v1268 = vmul.f32 %v1267, %v1266
      %v1269 = vmul.f32 %v1268, 0.25
      %v1270 = vsel %vm193, %v1252, -inf
      %1271 = vmax.xlane.f32.xlu0 %v1270
      %v1272 = vpop.xlane.xlu0 %1271
      %v1273 = vsub.f32 %v1252, %v1272
      %v1274 = vmul.f32 %v1273, 1.442695
      %v1275 = vpow.pop %v1274
      %v1276 = vsel %vm193, %v1275, 0.0
      %1277 = vadd.xlane.f32.xlu0 %v1276
      %v1278 = vpop.xlane.xlu0 %1277
      %v1279 = vlog2.pop %v1278
      %v1280 = vmul.f32 %v1279, 0.6931472
      %v1281 = vsub.f32 %v1273, %v1280
      %v1282 = vsel %vm193, %v1269, -inf
      %1283 = vmax.xlane.f32.xlu0 %v1282
      %v1284 = vpop.xlane.xlu0 %1283
      %v1285 = vsub.f32 %v1269, %v1284
      %v1286 = vmul.f32 %v1285, 1.442695
      %v1287 = vpow.pop %v1286
      %v1288 = vsel %vm193, %v1287, 0.0
      %1289 = vadd.xlane.f32.xlu0 %v1288
      %v1290 = vpop.xlane.xlu0 %1289
      %v1291 = vlog2.pop %v1290
      %v1292 = vmul.f32 %v1291, 0.6931472
      %v1293 = vsub.f32 %v1285, %v1292
      %v1294 = vmul.f32 %v1281, 1.442695
      %v1295 = vpow.pop %v1294
      %v1296 = vsub.f32 %v1281, %v1293
      %v1297 = vmul.f32 %v1295, %v1296
      %v1298 = vsel %vm193, %v1297, 0.0
      %1299 = vadd.xlane.f32.xlu0 %v1298
      %v1300 = vpop.xlane.xlu0 %1299
      %v1301 = vrot.slane %v1300, 4
      %v1302 = vadd.f32 %v1300, %v1301
      %v1303 = vrot.slane %v1302, 2
      %v1304 = vadd.f32 %v1302, %v1303
      %v1305 = vrot.slane %v1304, 1
      %v1306 = vadd.f32 %v1304, %v1305
      %s1307 = vtos %v1306
      %s1308 = smul.f32 %s1307, 16.0
      %v1309 = vrcp.pop 8.0
      %s1310 = vtos %v1309
      %s1311 = smul.f32 %s1308, %s1310
      %s1312 = scalar_lea.smem [#allocation9], 0
      %1313 = sst [smem:[%s1312]] %s1311
    $region25: #{tpu_custom_call.1} parent=1 // pred_fallthru
      _
    // Predicated region
    $region26: #{tpu_custom_call.1} parent=1 // pred_check
      _
    $region27: #{tpu_custom_call.1} parent=1 // pred_check_branch
      %1315 = sbr.rel (0) target = $region29
    $region28: #{tpu_custom_call.1} parent=1 // pred_region
      %s1317 = ssub.s32 16, 16
      %1318 = vsyncadd [#allocation6], %s1317
      %1321 = dma.smem_to_hbm [#allocation9], 16, %s2, [#allocation6]
    $region29: #{tpu_custom_call.1} parent=1 // pred_fallthru
      _
    // Predicated region
    $region30: #{tpu_custom_call.1} parent=1 // pred_check
      _
    $region31: #{tpu_custom_call.1} parent=1 // pred_check_branch
      %1323 = sbr.rel (0) target = $region33
    $region32: #{tpu_custom_call.1} parent=1 // pred_region
      %1324 = dma.done [#allocation6], 16
    $region33: #{tpu_custom_call.1} parent=1 // pred_fallthru
      _
    %1325 = sfence
    %1326 = vsyncpa [#allocation5], 1
    %1327 = vsyncpa [#allocation8], 1
    %1328 = vsyncpa [#allocation6], 1

</llo_original>
